<compile_context>
chip_gen: v7x
topology: tpu7x:2x2x1
jax: 0.10.0
libtpu: 0.0.40
codegen_flags: <defaults>
</compile_context>

<pallas_src>
import functools

import jax
import jax.numpy as jnp
from jax import lax
from jax.experimental import pallas as pl
from jax.experimental.pallas import tpu as pltpu


# ----------------------------------------------------------------------------
# Fused decoder-layer (+ final LayerNorm) kernel: one batch element per step.
# ----------------------------------------------------------------------------
def _decoder_layer_kernel(
    x_ref, mem_ref, srcm_ref, trgm_ref,
    lnp_ref, wqkv_ref, bqkv_ref, wos_ref, bos_ref,
    wqc_ref, bqc_ref, wkvc_ref, bkvc_ref, woc_ref, boc_ref,
    w1_ref, b1_ref, w2_ref, b2_ref, lnf_ref,
    o_ref, *, num_heads, eps):
    T, D = o_ref.shape                     # (T, D) after the batch dim is squeezed
    S = mem_ref.shape[0]
    Dh = D // num_heads
    scale = jnp.float32(1.0 / (Dh ** 0.5))
    neg_inf = jnp.float32(-1e9)

    lnp = lnp_ref[...]                     # (6, D): [g1, b1, g2, b2, g3, b3]
    lnf = lnf_ref[...]                     # (2, D): final decoder LayerNorm [g, b]

    def layernorm(x, g, b):
        mu = jnp.mean(x, axis=-1, keepdims=True)
        xc = x - mu
        var = jnp.mean(xc * xc, axis=-1, keepdims=True)
        return xc * lax.rsqrt(var + eps) * g + b

    def mha(q, k, v, mask, wo_ref, bo_ref):
        # Per-head attention with the output projection folded in:
        #   concat_h(softmax(q_h k_h^T) v_h) @ Wo  ==  sum_h softmax(.) v_h @ Wo[h]
        # q is pre-scaled by 1/sqrt(Dh).
        out = None
        for h in range(num_heads):         # unrolled at trace time (static slices)
            sl = slice(h * Dh, (h + 1) * Dh)
            s = jnp.dot(q[:, sl], k[:, sl].T,
                        preferred_element_type=jnp.float32)
            s = jnp.where(mask, s, neg_inf)
            s = s - jnp.max(s, axis=-1, keepdims=True)
            p = jnp.exp(s)
            p = p * pl.reciprocal(jnp.sum(p, axis=-1, keepdims=True), approx=True)
            ctx = jnp.dot(p, v[:, sl], preferred_element_type=jnp.float32)         # (T, Dh)
            contrib = jnp.dot(ctx, wo_ref[h], preferred_element_type=jnp.float32)  # (T, D)
            out = contrib if out is None else out + contrib
        return out + bo_ref[...]

    x = x_ref[...]                                                     # (T, D)

    # ---- masked self-attention (pre-LN) + residual --------------------------
    xn = layernorm(x, lnp[0:1], lnp[1:2])
    qkv = jnp.dot(xn, wqkv_ref[...], preferred_element_type=jnp.float32) + bqkv_ref[...]
    row = lax.broadcasted_iota(jnp.int32, (T, T), 0)
    col = lax.broadcasted_iota(jnp.int32, (T, T), 1)
    self_mask = jnp.logical_and(col <= row, trgm_ref[...] != 0)        # causal & trg padding
    h1 = x + mha(qkv[:, :D] * scale, qkv[:, D:2 * D], qkv[:, 2 * D:],
                 self_mask, wos_ref, bos_ref)

    # ---- cross-attention over encoder memory + residual ---------------------
    h1n = layernorm(h1, lnp[2:3], lnp[3:4])
    qc = jnp.dot(h1n, wqc_ref[...], preferred_element_type=jnp.float32) + bqc_ref[...]
    kv = jnp.dot(mem_ref[...], wkvc_ref[...], preferred_element_type=jnp.float32) + bkvc_ref[...]
    cross_mask = srcm_ref[...] != 0                                    # (1, S) src padding
    h2 = h1 + mha(qc * scale, kv[:, :D], kv[:, D:], cross_mask, woc_ref, boc_ref)

    # ---- position-wise feed-forward (pre-LN) + residual ---------------------
    h2n = layernorm(h2, lnp[4:5], lnp[5:6])
    f = jnp.maximum(
        jnp.dot(h2n, w1_ref[...], preferred_element_type=jnp.float32) + b1_ref[...], 0.0)
    h3 = h2 + jnp.dot(f, w2_ref[...], preferred_element_type=jnp.float32) + b2_ref[...]

    # ---- final decoder LayerNorm (fused) -------------------------------------
    o_ref[...] = layernorm(h3, lnf[0:1], lnf[1:2]).astype(o_ref.dtype)


def _const_index_map(ndim):
    return lambda b: (0,) * ndim


# ----------------------------------------------------------------------------
# Wrapper
# ----------------------------------------------------------------------------
def decoder_forward(params, trg_embed_0, trg_embed_1, encoder_output,
                    src_mask, trg_mask, num_heads):
    assert trg_mask is not None, "trg_mask required for Transformer"
    B, T, hidden = trg_embed_0.shape
    hidden_bb = trg_embed_1.shape[-1]
    S = encoder_output.shape[1]
    D = hidden + hidden_bb

    # Reference semantics: only the last layer's output reaches the final LN.
    lp = params["layers"][-1]

    # Fuse the two embedding streams once (tiny); everything else is in-kernel.
    x = jnp.concatenate([trg_embed_0, trg_embed_1], axis=-1)           # (B, T, D)
    srcm = src_mask.astype(jnp.int32).reshape(B, 1, S)                 # key padding only
    trgm = trg_mask.astype(jnp.int32).reshape(B, 1, T)                 # causal built in-kernel

    weights = (lp["lnp"], lp["wqkv"], lp["bqkv"], lp["wos"], lp["bos"],
               lp["wqc"], lp["bqc"], lp["wkvc"], lp["bkvc"], lp["woc"], lp["boc"],
               lp["w1"], lp["b1"], lp["w2"], lp["b2"], params["lnf"])

    in_specs = [
        pl.BlockSpec((None, T, D), lambda b: (b, 0, 0)),               # x
        pl.BlockSpec((None, S, D), lambda b: (b, 0, 0)),               # encoder memory
        pl.BlockSpec((None, 1, S), lambda b: (b, 0, 0)),               # src padding mask
        pl.BlockSpec((None, 1, T), lambda b: (b, 0, 0)),               # trg padding mask
    ] + [pl.BlockSpec(w.shape, _const_index_map(w.ndim)) for w in weights]

    kernel = functools.partial(_decoder_layer_kernel, num_heads=num_heads, eps=1e-6)

    return pl.pallas_call(
        kernel,
        out_shape=jax.ShapeDtypeStruct((B, T, D), jnp.float32),
        grid=(B,),
        in_specs=in_specs,
        out_specs=pl.BlockSpec((None, T, D), lambda b: (b, 0, 0)),
        compiler_params=pltpu.CompilerParams(dimension_semantics=("parallel",)),
    )(x, encoder_output, srcm, trgm, *weights)


# ----------------------------------------------------------------------------
# Pure-JAX reference (same math) for a correctness check.
# ----------------------------------------------------------------------------
def _reference_forward(params, trg_embed_0, trg_embed_1, encoder_output,
                       src_mask, trg_mask, num_heads, eps=1e-6):
    lp = params["layers"][-1]
    x = jnp.concatenate([trg_embed_0, trg_embed_1], axis=-1)
    B, T, D = x.shape
    S = encoder_output.shape[1]
    H, Dh = num_heads, D // num_heads
    scale = 1.0 / (Dh ** 0.5)
    lnp, lnf = lp["lnp"], params["lnf"]

    def ln(v, g, b):
        mu = jnp.mean(v, -1, keepdims=True)
        vc = v - mu
        var = jnp.mean(vc * vc, -1, keepdims=True)
        return vc * lax.rsqrt(var + eps) * g + b

    def mha(q, k, v, mask, wo, bo):
        qh = q.reshape(B, -1, H, Dh).transpose(0, 2, 1, 3)
        kh = k.reshape(B, -1, H, Dh).transpose(0, 2, 1, 3)
        vh = v.reshape(B, -1, H, Dh).transpose(0, 2, 1, 3)
        s = jnp.einsum("bhqd,bhkd->bhqk", qh, kh) * scale
        s = jnp.where(mask[:, None], s, -1e9)
        p = jax.nn.softmax(s, axis=-1)
        ctx = jnp.einsum("bhqk,bhkd->bhqd", p, vh)
        ctx = ctx.transpose(0, 2, 1, 3).reshape(B, -1, D)
        return ctx @ wo.reshape(D, D) + bo

    causal = jnp.arange(T)[:, None] >= jnp.arange(T)[None, :]          # (T, T)
    self_mask = jnp.logical_and(causal[None], trg_mask.astype(bool))   # (B, T, T)
    cross_mask = src_mask.astype(bool)                                 # (B, 1, S)

    xn = ln(x, lnp[0], lnp[1])
    qkv = xn @ lp["wqkv"] + lp["bqkv"]
    h1 = x + mha(qkv[..., :D], qkv[..., D:2 * D], qkv[..., 2 * D:],
                 self_mask, lp["wos"], lp["bos"])

    h1n = ln(h1, lnp[2], lnp[3])
    qc = h1n @ lp["wqc"] + lp["bqc"]
    kv = encoder_output @ lp["wkvc"] + lp["bkvc"]
    h2 = h1 + mha(qc, kv[..., :D], kv[..., D:], cross_mask, lp["woc"], lp["boc"])

    h2n = ln(h2, lnp[4], lnp[5])
    f = jnp.maximum(h2n @ lp["w1"] + lp["b1"], 0.0)
    h3 = h2 + f @ lp["w2"] + lp["b2"]
    return ln(h3, lnf[0], lnf[1])


# ----------------------------------------------------------------------------
# Deterministic parameter init (fused/packed layouts precomputed here)
# ----------------------------------------------------------------------------
def init_params(key, hidden, hidden_bb, ff_size, num_layers, num_heads):
    D = hidden + hidden_bb
    Dh = D // num_heads

    def dense(k, fi, fo):
        return jax.random.normal(k, (fi, fo), jnp.float32) * 0.02

    ones = jnp.ones((D,), jnp.float32)
    zeros = jnp.zeros((D,), jnp.float32)

    params = {"layers": []}
    for lk in jax.random.split(key, num_layers):
        ks = jax.random.split(lk, 7)
        lp = {
            # fused QKV projection for self-attention
            "wqkv": dense(ks[0], D, 3 * D),
            "bqkv": jnp.zeros((1, 3 * D), jnp.float32),
            # output projection stored per head: (H, Dh, D)
            "wos": dense(ks[1], D, D).reshape(num_heads, Dh, D),
            "bos": jnp.zeros((1, D), jnp.float32),
            # cross-attention: separate Q, fused KV over encoder memory
            "wqc": dense(ks[2], D, D),
            "bqc": jnp.zeros((1, D), jnp.float32),
            "wkvc": dense(ks[3], D, 2 * D),
            "bkvc": jnp.zeros((1, 2 * D), jnp.float32),
            "woc": dense(ks[4], D, D).reshape(num_heads, Dh, D),
            "boc": jnp.zeros((1, D), jnp.float32),
            # position-wise feed-forward
            "w1": dense(ks[5], D, ff_size), "b1": jnp.zeros((1, ff_size), jnp.float32),
            "w2": dense(ks[6], ff_size, D), "b2": jnp.zeros((1, D), jnp.float32),
            # the layer's three LayerNorms, stacked: [g1, b1, g2, b2, g3, b3]
            "lnp": jnp.stack([ones, zeros, ones, zeros, ones, zeros]),
        }
        params["layers"].append(lp)

    # decoder-level final LayerNorm (eps=1e-6 in the reference)
    params["lnf"] = jnp.stack([ones, zeros])
    return params


# ----------------------------------------------------------------------------
if __name__ == "__main__":
    # Small, shape-consistent configuration.
    B, T, S = 2, 8, 12
    hidden, hidden_bb, ff_size = 32, 8, 64
    num_heads, num_layers = 2, 2
    D = hidden + hidden_bb                      # 40, divisible by num_heads

    key = jax.random.PRNGKey(0)
    k0, k1, k2, kp = jax.random.split(key, 4)

    trg_embed_0 = jax.random.normal(k0, (B, T, hidden), jnp.float32)
    trg_embed_1 = jax.random.normal(k1, (B, T, hidden_bb), jnp.float32)
    encoder_output = jax.random.normal(k2, (B, S, D), jnp.float32)

    src_mask = jnp.ones((B, 1, S), dtype=bool)
    src_mask = src_mask.at[1, 0, S // 2:].set(False)   # padded source in batch 1
    trg_mask = jnp.ones((B, 1, T), dtype=bool)

    params = init_params(kp, hidden, hidden_bb, ff_size, num_layers, num_heads)

    out = decoder_forward(params, trg_embed_0, trg_embed_1, encoder_output,
                          src_mask, trg_mask, num_heads)
    out = jax.block_until_ready(out)

    ref = _reference_forward(params, trg_embed_0, trg_embed_1, encoder_output,
                             src_mask, trg_mask, num_heads)
    ref = jax.block_until_ready(ref)

    assert out.shape == (B, T, D), out.shape
    assert bool(jnp.all(jnp.isfinite(out)))
    assert bool(jnp.allclose(out, ref, atol=3e-2, rtol=3e-2)), float(
        jnp.max(jnp.abs(out - ref)))
    print("KERNEL_OK")
</pallas_src>

<mosaic_0001>
module attributes {stable_mosaic.version = 11 : i64} {
  func.func @_decoder_layer_kernel(%arg0: i32, %arg1: memref<1x8x40xf32, #tpu.memory_space<vmem>>, %arg2: memref<1x12x40xf32, #tpu.memory_space<vmem>>, %arg3: memref<1x1x12xi32, #tpu.memory_space<vmem>>, %arg4: memref<1x1x8xi32, #tpu.memory_space<vmem>>, %arg5: memref<6x40xf32, #tpu.memory_space<vmem>>, %arg6: memref<40x120xf32, #tpu.memory_space<vmem>>, %arg7: memref<1x120xf32, #tpu.memory_space<vmem>>, %arg8: memref<2x20x40xf32, #tpu.memory_space<vmem>>, %arg9: memref<1x40xf32, #tpu.memory_space<vmem>>, %arg10: memref<40x40xf32, #tpu.memory_space<vmem>>, %arg11: memref<1x40xf32, #tpu.memory_space<vmem>>, %arg12: memref<40x80xf32, #tpu.memory_space<vmem>>, %arg13: memref<1x80xf32, #tpu.memory_space<vmem>>, %arg14: memref<2x20x40xf32, #tpu.memory_space<vmem>>, %arg15: memref<1x40xf32, #tpu.memory_space<vmem>>, %arg16: memref<40x64xf32, #tpu.memory_space<vmem>>, %arg17: memref<1x64xf32, #tpu.memory_space<vmem>>, %arg18: memref<64x40xf32, #tpu.memory_space<vmem>>, %arg19: memref<1x40xf32, #tpu.memory_space<vmem>>, %arg20: memref<2x40xf32, #tpu.memory_space<vmem>>, %arg21: memref<1x8x40xf32, #tpu.memory_space<vmem>>) attributes {dimension_semantics = [#tpu.dimension_semantics<parallel>], iteration_bounds = array<i64: 2>, scalar_prefetch = 0 : i64, scratch_operands = 0 : i64, tpu.core_type = #tpu.core_type<tc>, window_params = [{transform_indices = @transform_0, window_bounds = array<i64: 1, 8, 40>}, {transform_indices = @transform_1, window_bounds = array<i64: 1, 12, 40>}, {transform_indices = @transform_2, window_bounds = array<i64: 1, 1, 12>}, {transform_indices = @transform_3, window_bounds = array<i64: 1, 1, 8>}, {pipeline_mode = #tpu.pipeline_mode<synchronous>, transform_indices = @transform_4, window_bounds = array<i64: 6, 40>}, {pipeline_mode = #tpu.pipeline_mode<synchronous>, transform_indices = @transform_5, window_bounds = array<i64: 40, 120>}, {pipeline_mode = #tpu.pipeline_mode<synchronous>, transform_indices = @transform_6, window_bounds = array<i64: 1, 120>}, {pipeline_mode = #tpu.pipeline_mode<synchronous>, transform_indices = @transform_7, window_bounds = array<i64: 2, 20, 40>}, {pipeline_mode = #tpu.pipeline_mode<synchronous>, transform_indices = @transform_8, window_bounds = array<i64: 1, 40>}, {pipeline_mode = #tpu.pipeline_mode<synchronous>, transform_indices = @transform_9, window_bounds = array<i64: 40, 40>}, {pipeline_mode = #tpu.pipeline_mode<synchronous>, transform_indices = @transform_10, window_bounds = array<i64: 1, 40>}, {pipeline_mode = #tpu.pipeline_mode<synchronous>, transform_indices = @transform_11, window_bounds = array<i64: 40, 80>}, {pipeline_mode = #tpu.pipeline_mode<synchronous>, transform_indices = @transform_12, window_bounds = array<i64: 1, 80>}, {pipeline_mode = #tpu.pipeline_mode<synchronous>, transform_indices = @transform_13, window_bounds = array<i64: 2, 20, 40>}, {pipeline_mode = #tpu.pipeline_mode<synchronous>, transform_indices = @transform_14, window_bounds = array<i64: 1, 40>}, {pipeline_mode = #tpu.pipeline_mode<synchronous>, transform_indices = @transform_15, window_bounds = array<i64: 40, 64>}, {pipeline_mode = #tpu.pipeline_mode<synchronous>, transform_indices = @transform_16, window_bounds = array<i64: 1, 64>}, {pipeline_mode = #tpu.pipeline_mode<synchronous>, transform_indices = @transform_17, window_bounds = array<i64: 64, 40>}, {pipeline_mode = #tpu.pipeline_mode<synchronous>, transform_indices = @transform_18, window_bounds = array<i64: 1, 40>}, {pipeline_mode = #tpu.pipeline_mode<synchronous>, transform_indices = @transform_19, window_bounds = array<i64: 2, 40>}, {transform_indices = @transform_20, window_bounds = array<i64: 1, 8, 40>}]} {
    %c0 = arith.constant 0 : index
    %c0_0 = arith.constant 0 : index
    %0 = vector.load %arg5[%c0, %c0_0] : memref<6x40xf32, #tpu.memory_space<vmem>>, vector<6x40xf32>
    %c0_1 = arith.constant 0 : index
    %c0_2 = arith.constant 0 : index
    %1 = vector.load %arg20[%c0_1, %c0_2] : memref<2x40xf32, #tpu.memory_space<vmem>>, vector<2x40xf32>
    %c0_3 = arith.constant 0 : index
    %c0_4 = arith.constant 0 : index
    %c0_5 = arith.constant 0 : index
    %2 = vector.load %arg1[%c0_3, %c0_4, %c0_5] : memref<1x8x40xf32, #tpu.memory_space<vmem>>, vector<1x8x40xf32>
    %3 = vector.shape_cast %2 : vector<1x8x40xf32> to vector<8x40xf32>
    %4 = vector.extract_strided_slice %0 {offsets = [0, 0], sizes = [1, 40], strides = [1, 1]} : vector<6x40xf32> to vector<1x40xf32>
    %5 = vector.extract_strided_slice %0 {offsets = [1, 0], sizes = [1, 40], strides = [1, 1]} : vector<6x40xf32> to vector<1x40xf32>
    %cst = arith.constant dense<0.000000e+00> : vector<8xf32>
    %6 = vector.multi_reduction <add>, %3, %cst [1] : vector<8x40xf32> to vector<8xf32>
    %7 = vector.shape_cast %6 : vector<8xf32> to vector<8x1xf32>
    %cst_6 = arith.constant 4.000000e+01 : f32
    %8 = vector.broadcast %cst_6 : f32 to vector<8x1xf32>
    %9 = arith.divf %7, %8 : vector<8x1xf32>
    %10 = vector.broadcast %9 : vector<8x1xf32> to vector<8x40xf32>
    %11 = arith.subf %3, %10 : vector<8x40xf32>
    %12 = arith.mulf %11, %11 : vector<8x40xf32>
    %cst_7 = arith.constant dense<0.000000e+00> : vector<8xf32>
    %13 = vector.multi_reduction <add>, %12, %cst_7 [1] : vector<8x40xf32> to vector<8xf32>
    %14 = vector.shape_cast %13 : vector<8xf32> to vector<8x1xf32>
    %cst_8 = arith.constant 4.000000e+01 : f32
    %15 = vector.broadcast %cst_8 : f32 to vector<8x1xf32>
    %16 = arith.divf %14, %15 : vector<8x1xf32>
    %cst_9 = arith.constant 9.99999997E-7 : f32
    %17 = vector.broadcast %cst_9 : f32 to vector<8x1xf32>
    %18 = arith.addf %16, %17 : vector<8x1xf32>
    %19 = math.rsqrt %18 : vector<8x1xf32>
    %20 = vector.broadcast %19 : vector<8x1xf32> to vector<8x40xf32>
    %21 = arith.mulf %11, %20 : vector<8x40xf32>
    %22 = vector.broadcast %4 : vector<1x40xf32> to vector<8x40xf32>
    %23 = arith.mulf %21, %22 : vector<8x40xf32>
    %24 = vector.broadcast %5 : vector<1x40xf32> to vector<8x40xf32>
    %25 = arith.addf %23, %24 : vector<8x40xf32>
    %c0_10 = arith.constant 0 : index
    %c0_11 = arith.constant 0 : index
    %26 = vector.load %arg6[%c0_10, %c0_11] : memref<40x120xf32, #tpu.memory_space<vmem>>, vector<40x120xf32>
    %cst_12 = arith.constant dense<0.000000e+00> : vector<8x120xf32>
    %27 = tpu.matmul %25, %26, %cst_12 {dimension_numbers = #tpu.dot_dimension_numbers<[1], [0], [0], [1], [0, 0, 1, 1], [], []>} : vector<8x40xf32>, vector<40x120xf32>, vector<8x120xf32> -> vector<8x120xf32>
    %c0_13 = arith.constant 0 : index
    %c0_14 = arith.constant 0 : index
    %28 = vector.load %arg7[%c0_13, %c0_14] : memref<1x120xf32, #tpu.memory_space<vmem>>, vector<1x120xf32>
    %29 = vector.broadcast %28 : vector<1x120xf32> to vector<8x120xf32>
    %30 = arith.addf %27, %29 : vector<8x120xf32>
    %31 = tpu.iota {dimensions = array<i32: 0>} : vector<8x8xi32>
    %32 = tpu.iota {dimensions = array<i32: 1>} : vector<8x8xi32>
    %33 = arith.cmpi sle, %32, %31 : vector<8x8xi32>
    %c0_15 = arith.constant 0 : index
    %c0_16 = arith.constant 0 : index
    %c0_17 = arith.constant 0 : index
    %34 = vector.load %arg4[%c0_15, %c0_16, %c0_17] : memref<1x1x8xi32, #tpu.memory_space<vmem>>, vector<1x1x8xi32>
    %35 = vector.shape_cast %34 : vector<1x1x8xi32> to vector<1x8xi32>
    %c0_i32 = arith.constant 0 : i32
    %36 = vector.broadcast %c0_i32 : i32 to vector<1x8xi32>
    %37 = arith.cmpi ne, %35, %36 : vector<1x8xi32>
    %38 = vector.broadcast %37 : vector<1x8xi1> to vector<8x8xi1>
    %39 = arith.andi %33, %38 : vector<8x8xi1>
    %40 = vector.extract_strided_slice %30 {offsets = [0, 0], sizes = [8, 40], strides = [1, 1]} : vector<8x120xf32> to vector<8x40xf32>
    %cst_18 = arith.constant 0.223606795 : f32
    %41 = vector.broadcast %cst_18 : f32 to vector<8x40xf32>
    %42 = arith.mulf %40, %41 : vector<8x40xf32>
    %43 = vector.extract_strided_slice %30 {offsets = [0, 40], sizes = [8, 40], strides = [1, 1]} : vector<8x120xf32> to vector<8x40xf32>
    %44 = vector.extract_strided_slice %30 {offsets = [0, 80], sizes = [8, 40], strides = [1, 1]} : vector<8x120xf32> to vector<8x40xf32>
    %45 = vector.extract_strided_slice %42 {offsets = [0, 0], sizes = [8, 20], strides = [1, 1]} : vector<8x40xf32> to vector<8x20xf32>
    %46 = vector.extract_strided_slice %43 {offsets = [0, 0], sizes = [8, 20], strides = [1, 1]} : vector<8x40xf32> to vector<8x20xf32>
    %47 = tpu.transpose %46, [1, 0] : vector<8x20xf32> -> vector<20x8xf32>
    %cst_19 = arith.constant dense<0.000000e+00> : vector<8x8xf32>
    %48 = tpu.matmul %45, %47, %cst_19 {dimension_numbers = #tpu.dot_dimension_numbers<[1], [0], [0], [1], [0, 0, 1, 1], [], []>} : vector<8x20xf32>, vector<20x8xf32>, vector<8x8xf32> -> vector<8x8xf32>
    %cst_20 = arith.constant -1.000000e+09 : f32
    %49 = vector.broadcast %cst_20 : f32 to vector<8x8xf32>
    %50 = arith.select %39, %48, %49 : vector<8x8xi1>, vector<8x8xf32>
    %cst_21 = arith.constant dense<0xFF800000> : vector<8xf32>
    %51 = vector.multi_reduction <maximumf>, %50, %cst_21 [1] : vector<8x8xf32> to vector<8xf32>
    %52 = vector.shape_cast %51 : vector<8xf32> to vector<8x1xf32>
    %53 = vector.broadcast %52 : vector<8x1xf32> to vector<8x8xf32>
    %54 = arith.subf %50, %53 : vector<8x8xf32>
    %55 = math.exp %54 : vector<8x8xf32>
    %cst_22 = arith.constant dense<0.000000e+00> : vector<8xf32>
    %56 = vector.multi_reduction <add>, %55, %cst_22 [1] : vector<8x8xf32> to vector<8xf32>
    %57 = vector.shape_cast %56 : vector<8xf32> to vector<8x1xf32>
    %58 = tpu.reciprocal %57 {approx = true} : vector<8x1xf32> -> vector<8x1xf32>
    %59 = vector.broadcast %58 : vector<8x1xf32> to vector<8x8xf32>
    %60 = arith.mulf %55, %59 : vector<8x8xf32>
    %61 = vector.extract_strided_slice %44 {offsets = [0, 0], sizes = [8, 20], strides = [1, 1]} : vector<8x40xf32> to vector<8x20xf32>
    %cst_23 = arith.constant dense<0.000000e+00> : vector<8x20xf32>
    %62 = tpu.matmul %60, %61, %cst_23 {dimension_numbers = #tpu.dot_dimension_numbers<[1], [0], [0], [1], [0, 0, 1, 1], [], []>} : vector<8x8xf32>, vector<8x20xf32>, vector<8x20xf32> -> vector<8x20xf32>
    %c0_24 = arith.constant 0 : index
    %c0_25 = arith.constant 0 : index
    %c0_26 = arith.constant 0 : index
    %63 = vector.load %arg8[%c0_24, %c0_25, %c0_26] : memref<2x20x40xf32, #tpu.memory_space<vmem>>, vector<1x20x40xf32>
    %64 = vector.shape_cast %63 : vector<1x20x40xf32> to vector<20x40xf32>
    %cst_27 = arith.constant dense<0.000000e+00> : vector<8x40xf32>
    %65 = tpu.matmul %62, %64, %cst_27 {dimension_numbers = #tpu.dot_dimension_numbers<[1], [0], [0], [1], [0, 0, 1, 1], [], []>} : vector<8x20xf32>, vector<20x40xf32>, vector<8x40xf32> -> vector<8x40xf32>
    %66 = vector.extract_strided_slice %42 {offsets = [0, 20], sizes = [8, 20], strides = [1, 1]} : vector<8x40xf32> to vector<8x20xf32>
    %67 = vector.extract_strided_slice %43 {offsets = [0, 20], sizes = [8, 20], strides = [1, 1]} : vector<8x40xf32> to vector<8x20xf32>
    %68 = tpu.transpose %67, [1, 0] : vector<8x20xf32> -> vector<20x8xf32>
    %cst_28 = arith.constant dense<0.000000e+00> : vector<8x8xf32>
    %69 = tpu.matmul %66, %68, %cst_28 {dimension_numbers = #tpu.dot_dimension_numbers<[1], [0], [0], [1], [0, 0, 1, 1], [], []>} : vector<8x20xf32>, vector<20x8xf32>, vector<8x8xf32> -> vector<8x8xf32>
    %cst_29 = arith.constant -1.000000e+09 : f32
    %70 = vector.broadcast %cst_29 : f32 to vector<8x8xf32>
    %71 = arith.select %39, %69, %70 : vector<8x8xi1>, vector<8x8xf32>
    %cst_30 = arith.constant dense<0xFF800000> : vector<8xf32>
    %72 = vector.multi_reduction <maximumf>, %71, %cst_30 [1] : vector<8x8xf32> to vector<8xf32>
    %73 = vector.shape_cast %72 : vector<8xf32> to vector<8x1xf32>
    %74 = vector.broadcast %73 : vector<8x1xf32> to vector<8x8xf32>
    %75 = arith.subf %71, %74 : vector<8x8xf32>
    %76 = math.exp %75 : vector<8x8xf32>
    %cst_31 = arith.constant dense<0.000000e+00> : vector<8xf32>
    %77 = vector.multi_reduction <add>, %76, %cst_31 [1] : vector<8x8xf32> to vector<8xf32>
    %78 = vector.shape_cast %77 : vector<8xf32> to vector<8x1xf32>
    %79 = tpu.reciprocal %78 {approx = true} : vector<8x1xf32> -> vector<8x1xf32>
    %80 = vector.broadcast %79 : vector<8x1xf32> to vector<8x8xf32>
    %81 = arith.mulf %76, %80 : vector<8x8xf32>
    %82 = vector.extract_strided_slice %44 {offsets = [0, 20], sizes = [8, 20], strides = [1, 1]} : vector<8x40xf32> to vector<8x20xf32>
    %cst_32 = arith.constant dense<0.000000e+00> : vector<8x20xf32>
    %83 = tpu.matmul %81, %82, %cst_32 {dimension_numbers = #tpu.dot_dimension_numbers<[1], [0], [0], [1], [0, 0, 1, 1], [], []>} : vector<8x8xf32>, vector<8x20xf32>, vector<8x20xf32> -> vector<8x20xf32>
    %c1 = arith.constant 1 : index
    %c0_33 = arith.constant 0 : index
    %c0_34 = arith.constant 0 : index
    %84 = vector.load %arg8[%c1, %c0_33, %c0_34] : memref<2x20x40xf32, #tpu.memory_space<vmem>>, vector<1x20x40xf32>
    %85 = vector.shape_cast %84 : vector<1x20x40xf32> to vector<20x40xf32>
    %cst_35 = arith.constant dense<0.000000e+00> : vector<8x40xf32>
    %86 = tpu.matmul %83, %85, %cst_35 {dimension_numbers = #tpu.dot_dimension_numbers<[1], [0], [0], [1], [0, 0, 1, 1], [], []>} : vector<8x20xf32>, vector<20x40xf32>, vector<8x40xf32> -> vector<8x40xf32>
    %87 = arith.addf %65, %86 : vector<8x40xf32>
    %c0_36 = arith.constant 0 : index
    %c0_37 = arith.constant 0 : index
    %88 = vector.load %arg9[%c0_36, %c0_37] : memref<1x40xf32, #tpu.memory_space<vmem>>, vector<1x40xf32>
    %89 = vector.broadcast %88 : vector<1x40xf32> to vector<8x40xf32>
    %90 = arith.addf %87, %89 : vector<8x40xf32>
    %91 = arith.addf %3, %90 : vector<8x40xf32>
    %92 = vector.extract_strided_slice %0 {offsets = [2, 0], sizes = [1, 40], strides = [1, 1]} : vector<6x40xf32> to vector<1x40xf32>
    %93 = vector.extract_strided_slice %0 {offsets = [3, 0], sizes = [1, 40], strides = [1, 1]} : vector<6x40xf32> to vector<1x40xf32>
    %cst_38 = arith.constant dense<0.000000e+00> : vector<8xf32>
    %94 = vector.multi_reduction <add>, %91, %cst_38 [1] : vector<8x40xf32> to vector<8xf32>
    %95 = vector.shape_cast %94 : vector<8xf32> to vector<8x1xf32>
    %cst_39 = arith.constant 4.000000e+01 : f32
    %96 = vector.broadcast %cst_39 : f32 to vector<8x1xf32>
    %97 = arith.divf %95, %96 : vector<8x1xf32>
    %98 = vector.broadcast %97 : vector<8x1xf32> to vector<8x40xf32>
    %99 = arith.subf %91, %98 : vector<8x40xf32>
    %100 = arith.mulf %99, %99 : vector<8x40xf32>
    %cst_40 = arith.constant dense<0.000000e+00> : vector<8xf32>
    %101 = vector.multi_reduction <add>, %100, %cst_40 [1] : vector<8x40xf32> to vector<8xf32>
    %102 = vector.shape_cast %101 : vector<8xf32> to vector<8x1xf32>
    %cst_41 = arith.constant 4.000000e+01 : f32
    %103 = vector.broadcast %cst_41 : f32 to vector<8x1xf32>
    %104 = arith.divf %102, %103 : vector<8x1xf32>
    %cst_42 = arith.constant 9.99999997E-7 : f32
    %105 = vector.broadcast %cst_42 : f32 to vector<8x1xf32>
    %106 = arith.addf %104, %105 : vector<8x1xf32>
    %107 = math.rsqrt %106 : vector<8x1xf32>
    %108 = vector.broadcast %107 : vector<8x1xf32> to vector<8x40xf32>
    %109 = arith.mulf %99, %108 : vector<8x40xf32>
    %110 = vector.broadcast %92 : vector<1x40xf32> to vector<8x40xf32>
    %111 = arith.mulf %109, %110 : vector<8x40xf32>
    %112 = vector.broadcast %93 : vector<1x40xf32> to vector<8x40xf32>
    %113 = arith.addf %111, %112 : vector<8x40xf32>
    %c0_43 = arith.constant 0 : index
    %c0_44 = arith.constant 0 : index
    %114 = vector.load %arg10[%c0_43, %c0_44] : memref<40x40xf32, #tpu.memory_space<vmem>>, vector<40x40xf32>
    %cst_45 = arith.constant dense<0.000000e+00> : vector<8x40xf32>
    %115 = tpu.matmul %113, %114, %cst_45 {dimension_numbers = #tpu.dot_dimension_numbers<[1], [0], [0], [1], [0, 0, 1, 1], [], []>} : vector<8x40xf32>, vector<40x40xf32>, vector<8x40xf32> -> vector<8x40xf32>
    %c0_46 = arith.constant 0 : index
    %c0_47 = arith.constant 0 : index
    %116 = vector.load %arg11[%c0_46, %c0_47] : memref<1x40xf32, #tpu.memory_space<vmem>>, vector<1x40xf32>
    %117 = vector.broadcast %116 : vector<1x40xf32> to vector<8x40xf32>
    %118 = arith.addf %115, %117 : vector<8x40xf32>
    %c0_48 = arith.constant 0 : index
    %c0_49 = arith.constant 0 : index
    %c0_50 = arith.constant 0 : index
    %119 = vector.load %arg2[%c0_48, %c0_49, %c0_50] : memref<1x12x40xf32, #tpu.memory_space<vmem>>, vector<1x12x40xf32>
    %120 = vector.shape_cast %119 : vector<1x12x40xf32> to vector<12x40xf32>
    %c0_51 = arith.constant 0 : index
    %c0_52 = arith.constant 0 : index
    %121 = vector.load %arg12[%c0_51, %c0_52] : memref<40x80xf32, #tpu.memory_space<vmem>>, vector<40x80xf32>
    %cst_53 = arith.constant dense<0.000000e+00> : vector<12x80xf32>
    %122 = tpu.matmul %120, %121, %cst_53 {dimension_numbers = #tpu.dot_dimension_numbers<[1], [0], [0], [1], [0, 0, 1, 1], [], []>} : vector<12x40xf32>, vector<40x80xf32>, vector<12x80xf32> -> vector<12x80xf32>
    %c0_54 = arith.constant 0 : index
    %c0_55 = arith.constant 0 : index
    %123 = vector.load %arg13[%c0_54, %c0_55] : memref<1x80xf32, #tpu.memory_space<vmem>>, vector<1x80xf32>
    %124 = vector.broadcast %123 : vector<1x80xf32> to vector<12x80xf32>
    %125 = arith.addf %122, %124 : vector<12x80xf32>
    %c0_56 = arith.constant 0 : index
    %c0_57 = arith.constant 0 : index
    %c0_58 = arith.constant 0 : index
    %126 = vector.load %arg3[%c0_56, %c0_57, %c0_58] : memref<1x1x12xi32, #tpu.memory_space<vmem>>, vector<1x1x12xi32>
    %127 = vector.shape_cast %126 : vector<1x1x12xi32> to vector<1x12xi32>
    %c0_i32_59 = arith.constant 0 : i32
    %128 = vector.broadcast %c0_i32_59 : i32 to vector<1x12xi32>
    %129 = arith.cmpi ne, %127, %128 : vector<1x12xi32>
    %cst_60 = arith.constant 0.223606795 : f32
    %130 = vector.broadcast %cst_60 : f32 to vector<8x40xf32>
    %131 = arith.mulf %118, %130 : vector<8x40xf32>
    %132 = vector.extract_strided_slice %125 {offsets = [0, 0], sizes = [12, 40], strides = [1, 1]} : vector<12x80xf32> to vector<12x40xf32>
    %133 = vector.extract_strided_slice %125 {offsets = [0, 40], sizes = [12, 40], strides = [1, 1]} : vector<12x80xf32> to vector<12x40xf32>
    %134 = vector.extract_strided_slice %131 {offsets = [0, 0], sizes = [8, 20], strides = [1, 1]} : vector<8x40xf32> to vector<8x20xf32>
    %135 = vector.extract_strided_slice %132 {offsets = [0, 0], sizes = [12, 20], strides = [1, 1]} : vector<12x40xf32> to vector<12x20xf32>
    %136 = tpu.transpose %135, [1, 0] : vector<12x20xf32> -> vector<20x12xf32>
    %cst_61 = arith.constant dense<0.000000e+00> : vector<8x12xf32>
    %137 = tpu.matmul %134, %136, %cst_61 {dimension_numbers = #tpu.dot_dimension_numbers<[1], [0], [0], [1], [0, 0, 1, 1], [], []>} : vector<8x20xf32>, vector<20x12xf32>, vector<8x12xf32> -> vector<8x12xf32>
    %cst_62 = arith.constant -1.000000e+09 : f32
    %138 = vector.shape_cast %129 : vector<1x12xi1> to vector<1x12xi1>
    %139 = vector.broadcast %138 : vector<1x12xi1> to vector<8x12xi1>
    %140 = vector.broadcast %cst_62 : f32 to vector<8x12xf32>
    %141 = arith.select %139, %137, %140 : vector<8x12xi1>, vector<8x12xf32>
    %cst_63 = arith.constant dense<0xFF800000> : vector<8xf32>
    %142 = vector.multi_reduction <maximumf>, %141, %cst_63 [1] : vector<8x12xf32> to vector<8xf32>
    %143 = vector.shape_cast %142 : vector<8xf32> to vector<8x1xf32>
    %144 = vector.broadcast %143 : vector<8x1xf32> to vector<8x12xf32>
    %145 = arith.subf %141, %144 : vector<8x12xf32>
    %146 = math.exp %145 : vector<8x12xf32>
    %cst_64 = arith.constant dense<0.000000e+00> : vector<8xf32>
    %147 = vector.multi_reduction <add>, %146, %cst_64 [1] : vector<8x12xf32> to vector<8xf32>
    %148 = vector.shape_cast %147 : vector<8xf32> to vector<8x1xf32>
    %149 = tpu.reciprocal %148 {approx = true} : vector<8x1xf32> -> vector<8x1xf32>
    %150 = vector.broadcast %149 : vector<8x1xf32> to vector<8x12xf32>
    %151 = arith.mulf %146, %150 : vector<8x12xf32>
    %152 = vector.extract_strided_slice %133 {offsets = [0, 0], sizes = [12, 20], strides = [1, 1]} : vector<12x40xf32> to vector<12x20xf32>
    %cst_65 = arith.constant dense<0.000000e+00> : vector<8x20xf32>
    %153 = tpu.matmul %151, %152, %cst_65 {dimension_numbers = #tpu.dot_dimension_numbers<[1], [0], [0], [1], [0, 0, 1, 1], [], []>} : vector<8x12xf32>, vector<12x20xf32>, vector<8x20xf32> -> vector<8x20xf32>
    %c0_66 = arith.constant 0 : index
    %c0_67 = arith.constant 0 : index
    %c0_68 = arith.constant 0 : index
    %154 = vector.load %arg14[%c0_66, %c0_67, %c0_68] : memref<2x20x40xf32, #tpu.memory_space<vmem>>, vector<1x20x40xf32>
    %155 = vector.shape_cast %154 : vector<1x20x40xf32> to vector<20x40xf32>
    %cst_69 = arith.constant dense<0.000000e+00> : vector<8x40xf32>
    %156 = tpu.matmul %153, %155, %cst_69 {dimension_numbers = #tpu.dot_dimension_numbers<[1], [0], [0], [1], [0, 0, 1, 1], [], []>} : vector<8x20xf32>, vector<20x40xf32>, vector<8x40xf32> -> vector<8x40xf32>
    %157 = vector.extract_strided_slice %131 {offsets = [0, 20], sizes = [8, 20], strides = [1, 1]} : vector<8x40xf32> to vector<8x20xf32>
    %158 = vector.extract_strided_slice %132 {offsets = [0, 20], sizes = [12, 20], strides = [1, 1]} : vector<12x40xf32> to vector<12x20xf32>
    %159 = tpu.transpose %158, [1, 0] : vector<12x20xf32> -> vector<20x12xf32>
    %cst_70 = arith.constant dense<0.000000e+00> : vector<8x12xf32>
    %160 = tpu.matmul %157, %159, %cst_70 {dimension_numbers = #tpu.dot_dimension_numbers<[1], [0], [0], [1], [0, 0, 1, 1], [], []>} : vector<8x20xf32>, vector<20x12xf32>, vector<8x12xf32> -> vector<8x12xf32>
    %cst_71 = arith.constant -1.000000e+09 : f32
    %161 = vector.shape_cast %129 : vector<1x12xi1> to vector<1x12xi1>
    %162 = vector.broadcast %161 : vector<1x12xi1> to vector<8x12xi1>
    %163 = vector.broadcast %cst_71 : f32 to vector<8x12xf32>
    %164 = arith.select %162, %160, %163 : vector<8x12xi1>, vector<8x12xf32>
    %cst_72 = arith.constant dense<0xFF800000> : vector<8xf32>
    %165 = vector.multi_reduction <maximumf>, %164, %cst_72 [1] : vector<8x12xf32> to vector<8xf32>
    %166 = vector.shape_cast %165 : vector<8xf32> to vector<8x1xf32>
    %167 = vector.broadcast %166 : vector<8x1xf32> to vector<8x12xf32>
    %168 = arith.subf %164, %167 : vector<8x12xf32>
    %169 = math.exp %168 : vector<8x12xf32>
    %cst_73 = arith.constant dense<0.000000e+00> : vector<8xf32>
    %170 = vector.multi_reduction <add>, %169, %cst_73 [1] : vector<8x12xf32> to vector<8xf32>
    %171 = vector.shape_cast %170 : vector<8xf32> to vector<8x1xf32>
    %172 = tpu.reciprocal %171 {approx = true} : vector<8x1xf32> -> vector<8x1xf32>
    %173 = vector.broadcast %172 : vector<8x1xf32> to vector<8x12xf32>
    %174 = arith.mulf %169, %173 : vector<8x12xf32>
    %175 = vector.extract_strided_slice %133 {offsets = [0, 20], sizes = [12, 20], strides = [1, 1]} : vector<12x40xf32> to vector<12x20xf32>
    %cst_74 = arith.constant dense<0.000000e+00> : vector<8x20xf32>
    %176 = tpu.matmul %174, %175, %cst_74 {dimension_numbers = #tpu.dot_dimension_numbers<[1], [0], [0], [1], [0, 0, 1, 1], [], []>} : vector<8x12xf32>, vector<12x20xf32>, vector<8x20xf32> -> vector<8x20xf32>
    %c1_75 = arith.constant 1 : index
    %c0_76 = arith.constant 0 : index
    %c0_77 = arith.constant 0 : index
    %177 = vector.load %arg14[%c1_75, %c0_76, %c0_77] : memref<2x20x40xf32, #tpu.memory_space<vmem>>, vector<1x20x40xf32>
    %178 = vector.shape_cast %177 : vector<1x20x40xf32> to vector<20x40xf32>
    %cst_78 = arith.constant dense<0.000000e+00> : vector<8x40xf32>
    %179 = tpu.matmul %176, %178, %cst_78 {dimension_numbers = #tpu.dot_dimension_numbers<[1], [0], [0], [1], [0, 0, 1, 1], [], []>} : vector<8x20xf32>, vector<20x40xf32>, vector<8x40xf32> -> vector<8x40xf32>
    %180 = arith.addf %156, %179 : vector<8x40xf32>
    %c0_79 = arith.constant 0 : index
    %c0_80 = arith.constant 0 : index
    %181 = vector.load %arg15[%c0_79, %c0_80] : memref<1x40xf32, #tpu.memory_space<vmem>>, vector<1x40xf32>
    %182 = vector.broadcast %181 : vector<1x40xf32> to vector<8x40xf32>
    %183 = arith.addf %180, %182 : vector<8x40xf32>
    %184 = arith.addf %91, %183 : vector<8x40xf32>
    %185 = vector.extract_strided_slice %0 {offsets = [4, 0], sizes = [1, 40], strides = [1, 1]} : vector<6x40xf32> to vector<1x40xf32>
    %186 = vector.extract_strided_slice %0 {offsets = [5, 0], sizes = [1, 40], strides = [1, 1]} : vector<6x40xf32> to vector<1x40xf32>
    %cst_81 = arith.constant dense<0.000000e+00> : vector<8xf32>
    %187 = vector.multi_reduction <add>, %184, %cst_81 [1] : vector<8x40xf32> to vector<8xf32>
    %188 = vector.shape_cast %187 : vector<8xf32> to vector<8x1xf32>
    %cst_82 = arith.constant 4.000000e+01 : f32
    %189 = vector.broadcast %cst_82 : f32 to vector<8x1xf32>
    %190 = arith.divf %188, %189 : vector<8x1xf32>
    %191 = vector.broadcast %190 : vector<8x1xf32> to vector<8x40xf32>
    %192 = arith.subf %184, %191 : vector<8x40xf32>
    %193 = arith.mulf %192, %192 : vector<8x40xf32>
    %cst_83 = arith.constant dense<0.000000e+00> : vector<8xf32>
    %194 = vector.multi_reduction <add>, %193, %cst_83 [1] : vector<8x40xf32> to vector<8xf32>
    %195 = vector.shape_cast %194 : vector<8xf32> to vector<8x1xf32>
    %cst_84 = arith.constant 4.000000e+01 : f32
    %196 = vector.broadcast %cst_84 : f32 to vector<8x1xf32>
    %197 = arith.divf %195, %196 : vector<8x1xf32>
    %cst_85 = arith.constant 9.99999997E-7 : f32
    %198 = vector.broadcast %cst_85 : f32 to vector<8x1xf32>
    %199 = arith.addf %197, %198 : vector<8x1xf32>
    %200 = math.rsqrt %199 : vector<8x1xf32>
    %201 = vector.broadcast %200 : vector<8x1xf32> to vector<8x40xf32>
    %202 = arith.mulf %192, %201 : vector<8x40xf32>
    %203 = vector.broadcast %185 : vector<1x40xf32> to vector<8x40xf32>
    %204 = arith.mulf %202, %203 : vector<8x40xf32>
    %205 = vector.broadcast %186 : vector<1x40xf32> to vector<8x40xf32>
    %206 = arith.addf %204, %205 : vector<8x40xf32>
    %c0_86 = arith.constant 0 : index
    %c0_87 = arith.constant 0 : index
    %207 = vector.load %arg16[%c0_86, %c0_87] : memref<40x64xf32, #tpu.memory_space<vmem>>, vector<40x64xf32>
    %cst_88 = arith.constant dense<0.000000e+00> : vector<8x64xf32>
    %208 = tpu.matmul %206, %207, %cst_88 {dimension_numbers = #tpu.dot_dimension_numbers<[1], [0], [0], [1], [0, 0, 1, 1], [], []>} : vector<8x40xf32>, vector<40x64xf32>, vector<8x64xf32> -> vector<8x64xf32>
    %c0_89 = arith.constant 0 : index
    %c0_90 = arith.constant 0 : index
    %209 = vector.load %arg17[%c0_89, %c0_90] : memref<1x64xf32, #tpu.memory_space<vmem>>, vector<1x64xf32>
    %210 = vector.broadcast %209 : vector<1x64xf32> to vector<8x64xf32>
    %211 = arith.addf %208, %210 : vector<8x64xf32>
    %cst_91 = arith.constant 0.000000e+00 : f32
    %212 = vector.broadcast %cst_91 : f32 to vector<8x64xf32>
    %213 = arith.maximumf %211, %212 : vector<8x64xf32>
    %c0_92 = arith.constant 0 : index
    %c0_93 = arith.constant 0 : index
    %214 = vector.load %arg18[%c0_92, %c0_93] : memref<64x40xf32, #tpu.memory_space<vmem>>, vector<64x40xf32>
    %cst_94 = arith.constant dense<0.000000e+00> : vector<8x40xf32>
    %215 = tpu.matmul %213, %214, %cst_94 {dimension_numbers = #tpu.dot_dimension_numbers<[1], [0], [0], [1], [0, 0, 1, 1], [], []>} : vector<8x64xf32>, vector<64x40xf32>, vector<8x40xf32> -> vector<8x40xf32>
    %216 = arith.addf %184, %215 : vector<8x40xf32>
    %c0_95 = arith.constant 0 : index
    %c0_96 = arith.constant 0 : index
    %217 = vector.load %arg19[%c0_95, %c0_96] : memref<1x40xf32, #tpu.memory_space<vmem>>, vector<1x40xf32>
    %218 = vector.broadcast %217 : vector<1x40xf32> to vector<8x40xf32>
    %219 = arith.addf %216, %218 : vector<8x40xf32>
    %220 = vector.extract_strided_slice %1 {offsets = [0, 0], sizes = [1, 40], strides = [1, 1]} : vector<2x40xf32> to vector<1x40xf32>
    %221 = vector.extract_strided_slice %1 {offsets = [1, 0], sizes = [1, 40], strides = [1, 1]} : vector<2x40xf32> to vector<1x40xf32>
    %cst_97 = arith.constant dense<0.000000e+00> : vector<8xf32>
    %222 = vector.multi_reduction <add>, %219, %cst_97 [1] : vector<8x40xf32> to vector<8xf32>
    %223 = vector.shape_cast %222 : vector<8xf32> to vector<8x1xf32>
    %cst_98 = arith.constant 4.000000e+01 : f32
    %224 = vector.broadcast %cst_98 : f32 to vector<8x1xf32>
    %225 = arith.divf %223, %224 : vector<8x1xf32>
    %226 = vector.broadcast %225 : vector<8x1xf32> to vector<8x40xf32>
    %227 = arith.subf %219, %226 : vector<8x40xf32>
    %228 = arith.mulf %227, %227 : vector<8x40xf32>
    %cst_99 = arith.constant dense<0.000000e+00> : vector<8xf32>
    %229 = vector.multi_reduction <add>, %228, %cst_99 [1] : vector<8x40xf32> to vector<8xf32>
    %230 = vector.shape_cast %229 : vector<8xf32> to vector<8x1xf32>
    %cst_100 = arith.constant 4.000000e+01 : f32
    %231 = vector.broadcast %cst_100 : f32 to vector<8x1xf32>
    %232 = arith.divf %230, %231 : vector<8x1xf32>
    %cst_101 = arith.constant 9.99999997E-7 : f32
    %233 = vector.broadcast %cst_101 : f32 to vector<8x1xf32>
    %234 = arith.addf %232, %233 : vector<8x1xf32>
    %235 = math.rsqrt %234 : vector<8x1xf32>
    %236 = vector.broadcast %235 : vector<8x1xf32> to vector<8x40xf32>
    %237 = arith.mulf %227, %236 : vector<8x40xf32>
    %238 = vector.broadcast %220 : vector<1x40xf32> to vector<8x40xf32>
    %239 = arith.mulf %237, %238 : vector<8x40xf32>
    %240 = vector.broadcast %221 : vector<1x40xf32> to vector<8x40xf32>
    %241 = arith.addf %239, %240 : vector<8x40xf32>
    %c0_102 = arith.constant 0 : index
    %c0_103 = arith.constant 0 : index
    %c0_104 = arith.constant 0 : index
    %242 = vector.load %arg21[%c0_102, %c0_103, %c0_104] : memref<1x8x40xf32, #tpu.memory_space<vmem>>, vector<1x8x40xf32>
    %243 = vector.shape_cast %242 : vector<1x8x40xf32> to vector<8x40xf32>
    %244 = vector.shape_cast %241 : vector<8x40xf32> to vector<1x8x40xf32>
    tpu.vector_store %arg21[%c0_102, %c0_103, %c0_104], %244 {strides = array<i32>} : memref<1x8x40xf32, #tpu.memory_space<vmem>>, vector<1x8x40xf32>,
    return
  }
  func.func @transform_0(%arg0: i32) -> (i32, i32, i32) {
    %c0_i32 = arith.constant 0 : i32
    %c0_i32_0 = arith.constant 0 : i32
    %c0_i32_1 = arith.constant 0 : i32
    return %arg0, %c0_i32, %c0_i32_0 : i32, i32, i32
  }
  func.func @transform_1(%arg0: i32) -> (i32, i32, i32) {
    %c0_i32 = arith.constant 0 : i32
    %c0_i32_0 = arith.constant 0 : i32
    %c0_i32_1 = arith.constant 0 : i32
    return %arg0, %c0_i32, %c0_i32_0 : i32, i32, i32
  }
  func.func @transform_2(%arg0: i32) -> (i32, i32, i32) {
    %c0_i32 = arith.constant 0 : i32
    %c0_i32_0 = arith.constant 0 : i32
    %c0_i32_1 = arith.constant 0 : i32
    return %arg0, %c0_i32, %c0_i32_0 : i32, i32, i32
  }
  func.func @transform_3(%arg0: i32) -> (i32, i32, i32) {
    %c0_i32 = arith.constant 0 : i32
    %c0_i32_0 = arith.constant 0 : i32
    %c0_i32_1 = arith.constant 0 : i32
    return %arg0, %c0_i32, %c0_i32_0 : i32, i32, i32
  }
  func.func @transform_4(%arg0: i32) -> (i32, i32) {
    %c0_i32 = arith.constant 0 : i32
    %c0_i32_0 = arith.constant 0 : i32
    %c0_i32_1 = arith.constant 0 : i32
    return %c0_i32, %c0_i32_0 : i32, i32
  }
  func.func @transform_5(%arg0: i32) -> (i32, i32) {
    %c0_i32 = arith.constant 0 : i32
    %c0_i32_0 = arith.constant 0 : i32
    %c0_i32_1 = arith.constant 0 : i32
    return %c0_i32, %c0_i32_0 : i32, i32
  }
  func.func @transform_6(%arg0: i32) -> (i32, i32) {
    %c0_i32 = arith.constant 0 : i32
    %c0_i32_0 = arith.constant 0 : i32
    %c0_i32_1 = arith.constant 0 : i32
    return %c0_i32, %c0_i32_0 : i32, i32
  }
  func.func @transform_7(%arg0: i32) -> (i32, i32, i32) {
    %c0_i32 = arith.constant 0 : i32
    %c0_i32_0 = arith.constant 0 : i32
    %c0_i32_1 = arith.constant 0 : i32
    %c0_i32_2 = arith.constant 0 : i32
    return %c0_i32, %c0_i32_0, %c0_i32_1 : i32, i32, i32
  }
  func.func @transform_8(%arg0: i32) -> (i32, i32) {
    %c0_i32 = arith.constant 0 : i32
    %c0_i32_0 = arith.constant 0 : i32
    %c0_i32_1 = arith.constant 0 : i32
    return %c0_i32, %c0_i32_0 : i32, i32
  }
  func.func @transform_9(%arg0: i32) -> (i32, i32) {
    %c0_i32 = arith.constant 0 : i32
    %c0_i32_0 = arith.constant 0 : i32
    %c0_i32_1 = arith.constant 0 : i32
    return %c0_i32, %c0_i32_0 : i32, i32
  }
  func.func @transform_10(%arg0: i32) -> (i32, i32) {
    %c0_i32 = arith.constant 0 : i32
    %c0_i32_0 = arith.constant 0 : i32
    %c0_i32_1 = arith.constant 0 : i32
    return %c0_i32, %c0_i32_0 : i32, i32
  }
  func.func @transform_11(%arg0: i32) -> (i32, i32) {
    %c0_i32 = arith.constant 0 : i32
    %c0_i32_0 = arith.constant 0 : i32
    %c0_i32_1 = arith.constant 0 : i32
    return %c0_i32, %c0_i32_0 : i32, i32
  }
  func.func @transform_12(%arg0: i32) -> (i32, i32) {
    %c0_i32 = arith.constant 0 : i32
    %c0_i32_0 = arith.constant 0 : i32
    %c0_i32_1 = arith.constant 0 : i32
    return %c0_i32, %c0_i32_0 : i32, i32
  }
  func.func @transform_13(%arg0: i32) -> (i32, i32, i32) {
    %c0_i32 = arith.constant 0 : i32
    %c0_i32_0 = arith.constant 0 : i32
    %c0_i32_1 = arith.constant 0 : i32
    %c0_i32_2 = arith.constant 0 : i32
    return %c0_i32, %c0_i32_0, %c0_i32_1 : i32, i32, i32
  }
  func.func @transform_14(%arg0: i32) -> (i32, i32) {
    %c0_i32 = arith.constant 0 : i32
    %c0_i32_0 = arith.constant 0 : i32
    %c0_i32_1 = arith.constant 0 : i32
    return %c0_i32, %c0_i32_0 : i32, i32
  }
  func.func @transform_15(%arg0: i32) -> (i32, i32) {
    %c0_i32 = arith.constant 0 : i32
    %c0_i32_0 = arith.constant 0 : i32
    %c0_i32_1 = arith.constant 0 : i32
    return %c0_i32, %c0_i32_0 : i32, i32
  }
  func.func @transform_16(%arg0: i32) -> (i32, i32) {
    %c0_i32 = arith.constant 0 : i32
    %c0_i32_0 = arith.constant 0 : i32
    %c0_i32_1 = arith.constant 0 : i32
    return %c0_i32, %c0_i32_0 : i32, i32
  }
  func.func @transform_17(%arg0: i32) -> (i32, i32) {
    %c0_i32 = arith.constant 0 : i32
    %c0_i32_0 = arith.constant 0 : i32
    %c0_i32_1 = arith.constant 0 : i32
    return %c0_i32, %c0_i32_0 : i32, i32
  }
  func.func @transform_18(%arg0: i32) -> (i32, i32) {
    %c0_i32 = arith.constant 0 : i32
    %c0_i32_0 = arith.constant 0 : i32
    %c0_i32_1 = arith.constant 0 : i32
    return %c0_i32, %c0_i32_0 : i32, i32
  }
  func.func @transform_19(%arg0: i32) -> (i32, i32) {
    %c0_i32 = arith.constant 0 : i32
    %c0_i32_0 = arith.constant 0 : i32
    %c0_i32_1 = arith.constant 0 : i32
    return %c0_i32, %c0_i32_0 : i32, i32
  }
  func.func @transform_20(%arg0: i32) -> (i32, i32, i32) {
    %c0_i32 = arith.constant 0 : i32
    %c0_i32_0 = arith.constant 0 : i32
    %c0_i32_1 = arith.constant 0 : i32
    return %arg0, %c0_i32, %c0_i32_0 : i32, i32, i32
  }
}

</mosaic_0001>

<llo_original>
// kernel: tpu_custom_call.1
$region0: #{tpu_custom_call.1}
  #allocation0 [shape = 'u32[]', space=smem, size = 0x4, offset = 0x4, fixed_abs, tag = 'smem constant byte address 0x4 - core index']
  #allocation1 [shape = 'u32[144,128]{1,0:T(1,128)}', space=vmem, size = 0x12000, scoped, tag = 'internal scratch']
  %s0 = inlined_call_operand.vmem [shape: f32[2,8,40], index: 0, kind: input, shape index: {}]
  %s1 = inlined_call_operand.vmem [shape: f32[2,12,40], index: 1, kind: input, shape index: {}]
  %s2 = inlined_call_operand.vmem [shape: s32[2,1,12], index: 2, kind: input, shape index: {}]
  %s3 = inlined_call_operand.vmem [shape: s32[2,1,8], index: 3, kind: input, shape index: {}]
  %s4 = inlined_call_operand.vmem [shape: f32[6,40], index: 4, kind: input, shape index: {}]
  %s5 = inlined_call_operand.vmem [shape: f32[40,120], index: 5, kind: input, shape index: {}]
  %s6 = inlined_call_operand.vmem [shape: f32[1,120], index: 6, kind: input, shape index: {}]
  %s7 = inlined_call_operand.vmem [shape: f32[2,20,40], index: 7, kind: input, shape index: {}]
  %s8 = inlined_call_operand.vmem [shape: f32[1,40], index: 8, kind: input, shape index: {}]
  %s9 = inlined_call_operand.vmem [shape: f32[40,40], index: 9, kind: input, shape index: {}]
  %s10 = inlined_call_operand.vmem [shape: f32[1,40], index: 10, kind: input, shape index: {}]
  %s11 = inlined_call_operand.vmem [shape: f32[40,80], index: 11, kind: input, shape index: {}]
  %s12 = inlined_call_operand.vmem [shape: f32[1,80], index: 12, kind: input, shape index: {}]
  %s13 = inlined_call_operand.vmem [shape: f32[2,20,40], index: 13, kind: input, shape index: {}]
  %s14 = inlined_call_operand.vmem [shape: f32[1,40], index: 14, kind: input, shape index: {}]
  %s15 = inlined_call_operand.vmem [shape: f32[40,64], index: 15, kind: input, shape index: {}]
  %s16 = inlined_call_operand.vmem [shape: f32[1,64], index: 16, kind: input, shape index: {}]
  %s17 = inlined_call_operand.vmem [shape: f32[64,40], index: 17, kind: input, shape index: {}]
  %s18 = inlined_call_operand.vmem [shape: f32[1,40], index: 18, kind: input, shape index: {}]
  %s19 = inlined_call_operand.vmem [shape: f32[2,40], index: 19, kind: input, shape index: {}]
  %s20 = inlined_call_operand.hbm [shape: f32[2,8,40], index: 20, kind: output, shape index: {}]
  %s21 = sld [smem:[#allocation0]]
  $region113: #{tpu_custom_call.1} parent=0
    _
  %s23 = ssub.s32 1, %s21
  %s24 = scalar_select 0, %s23, %s21
  $region1: #{tpu_custom_call.1} parent=0
    #allocation2 [shape = 'u8[8192]{0}', space=vmem, size = 0x2000, scoped, tag = 'output window, operand 0']
    #allocation3 [shape = 's32[2]{0}', space=sflag, size = 0x8, scoped, tag = 'scoped memory for tpu_custom_call.1']
    %25 = vsyncpa [#allocation3], 0
    %s26 = scalar_lea.sflag [#allocation3], 1
    %27 = vsyncpa %s26, 0
    loop: start=0, step=1, limit=4
    $region2: #{tpu_custom_call.1} parent=1 // loop_pre_header
      _
    $region3: #{tpu_custom_call.1} parent=1 // loop_header
      %s29 = sphi 0, %s33
      %p30 = scmp.ge.s32.totalorder %s29, 4
      %s39 = sphi 0, %s41
      %s42 = sphi 0, %s39
      %s43 = sphi 0, %s42
      %s59 = sphi 0, %s43
      %s65 = sphi 0, %s67
      %s68 = sphi 0, %s65
      %s69 = sphi 0, %s68
      %s85 = sphi 0, %s69
      %s91 = sphi 0, %s93
      %s94 = sphi 0, %s91
      %s95 = sphi 0, %s94
      %s111 = sphi 0, %s95
      %s117 = sphi 0, %s119
      %s120 = sphi 0, %s117
      %s121 = sphi 0, %s120
      %s137 = sphi 0, %s121
      %s141 = sphi 0, %s141
      %s143 = sphi 0, %s141
      %s144 = sphi 0, %s143
      %s158 = sphi 0, %s144
      %s162 = sphi 0, %s162
      %s164 = sphi 0, %s162
      %s165 = sphi 0, %s164
      %s179 = sphi 0, %s165
      %s183 = sphi 0, %s183
      %s185 = sphi 0, %s183
      %s186 = sphi 0, %s185
      %s200 = sphi 0, %s186
      %s204 = sphi 0, %s204
      %s206 = sphi 0, %s204
      %s207 = sphi 0, %s206
      %s221 = sphi 0, %s207
      %s225 = sphi 0, %s225
      %s227 = sphi 0, %s225
      %s228 = sphi 0, %s227
      %s242 = sphi 0, %s228
      %s246 = sphi 0, %s246
      %s248 = sphi 0, %s246
      %s249 = sphi 0, %s248
      %s263 = sphi 0, %s249
      %s267 = sphi 0, %s267
      %s269 = sphi 0, %s267
      %s270 = sphi 0, %s269
      %s284 = sphi 0, %s270
      %s288 = sphi 0, %s288
      %s290 = sphi 0, %s288
      %s291 = sphi 0, %s290
      %s305 = sphi 0, %s291
      %s309 = sphi 0, %s309
      %s311 = sphi 0, %s309
      %s312 = sphi 0, %s311
      %s326 = sphi 0, %s312
      %s330 = sphi 0, %s330
      %s332 = sphi 0, %s330
      %s333 = sphi 0, %s332
      %s347 = sphi 0, %s333
      %s351 = sphi 0, %s351
      %s353 = sphi 0, %s351
      %s354 = sphi 0, %s353
      %s368 = sphi 0, %s354
      %s372 = sphi 0, %s372
      %s374 = sphi 0, %s372
      %s375 = sphi 0, %s374
      %s389 = sphi 0, %s375
      %s393 = sphi 0, %s393
      %s395 = sphi 0, %s393
      %s396 = sphi 0, %s395
      %s410 = sphi 0, %s396
      %s414 = sphi 0, %s414
      %s416 = sphi 0, %s414
      %s417 = sphi 0, %s416
      %s431 = sphi 0, %s417
      %s435 = sphi 0, %s435
      %s437 = sphi 0, %s435
      %s438 = sphi 0, %s437
      %s452 = sphi 0, %s438
      %s456 = sphi 0, %s456
      %s458 = sphi 0, %s456
      %s459 = sphi 0, %s458
      %s473 = sphi 0, %s459
      %s479 = sphi 0, %s481
      %s482 = sphi 0, %s479
      %s483 = sphi 0, %s482
      %s499 = sphi 0, %s483
    $region4: #{tpu_custom_call.1} parent=1 // loop_header_branch
      %32 = sbr.rel (%p30) target = $region8
    $region5: #{tpu_custom_call.1} parent=1 // loop_body
      %s34 = ssub.s32 %s29, 1
      %s35 = ssub.s32 %s29, 2
      %s36 = sadd.s32 %s29, 1
      %s37 = ssub.s32 %s29, %s36
      %p38 = scmp.eq.s32.totalorder %s37, 0
      %s40 = sadd.s32 %s39, 1
      %s41 = scalar_select %p38, %s39, %s40
      %p44 = pneg %p38
      %p45 = scmp.eq.s32.totalorder %s29, 1
      %p46 = por %p44, %p45
      %p47 = scmp.ne.s32.totalorder %s39, %s42
      %p48 = scmp.eq.s32.totalorder %s29, 0
      %p49 = por %p47, %p48
      %p50 = scmp.ne.s32.totalorder %s39, %s42
      %p51 = scmp.eq.s32.totalorder %s34, 1
      %p52 = por %p50, %p51
      %p53 = scmp.ne.s32.totalorder %s42, %s43
      %p54 = scmp.eq.s32.totalorder %s34, 0
      %p55 = por %p53, %p54
      %p56 = scmp.ne.s32.totalorder %s42, %s43
      %p57 = scmp.eq.s32.totalorder %s35, 1
      %p58 = por %p56, %p57
      %p60 = scmp.ne.s32.totalorder %s43, %s59
      %p61 = scmp.eq.s32.totalorder %s35, 0
      %p62 = por %p60, %p61
      %s63 = ssub.s32 %s29, %s36
      %p64 = scmp.eq.s32.totalorder %s63, 0
      %s66 = sadd.s32 %s65, 1
      %s67 = scalar_select %p64, %s65, %s66
      %p70 = pneg %p64
      %p71 = scmp.eq.s32.totalorder %s29, 1
      %p72 = por %p70, %p71
      %p73 = scmp.ne.s32.totalorder %s65, %s68
      %p74 = scmp.eq.s32.totalorder %s29, 0
      %p75 = por %p73, %p74
      %p76 = scmp.ne.s32.totalorder %s65, %s68
      %p77 = scmp.eq.s32.totalorder %s34, 1
      %p78 = por %p76, %p77
      %p79 = scmp.ne.s32.totalorder %s68, %s69
      %p80 = scmp.eq.s32.totalorder %s34, 0
      %p81 = por %p79, %p80
      %p82 = scmp.ne.s32.totalorder %s68, %s69
      %p83 = scmp.eq.s32.totalorder %s35, 1
      %p84 = por %p82, %p83
      %p86 = scmp.ne.s32.totalorder %s69, %s85
      %p87 = scmp.eq.s32.totalorder %s35, 0
      %p88 = por %p86, %p87
      %s89 = ssub.s32 %s29, %s36
      %p90 = scmp.eq.s32.totalorder %s89, 0
      %s92 = sadd.s32 %s91, 1
      %s93 = scalar_select %p90, %s91, %s92
      %p96 = pneg %p90
      %p97 = scmp.eq.s32.totalorder %s29, 1
      %p98 = por %p96, %p97
      %p99 = scmp.ne.s32.totalorder %s91, %s94
      %p100 = scmp.eq.s32.totalorder %s29, 0
      %p101 = por %p99, %p100
      %p102 = scmp.ne.s32.totalorder %s91, %s94
      %p103 = scmp.eq.s32.totalorder %s34, 1
      %p104 = por %p102, %p103
      %p105 = scmp.ne.s32.totalorder %s94, %s95
      %p106 = scmp.eq.s32.totalorder %s34, 0
      %p107 = por %p105, %p106
      %p108 = scmp.ne.s32.totalorder %s94, %s95
      %p109 = scmp.eq.s32.totalorder %s35, 1
      %p110 = por %p108, %p109
      %p112 = scmp.ne.s32.totalorder %s95, %s111
      %p113 = scmp.eq.s32.totalorder %s35, 0
      %p114 = por %p112, %p113
      %s115 = ssub.s32 %s29, %s36
      %p116 = scmp.eq.s32.totalorder %s115, 0
      %s118 = sadd.s32 %s117, 1
      %s119 = scalar_select %p116, %s117, %s118
      %p122 = pneg %p116
      %p123 = scmp.eq.s32.totalorder %s29, 1
      %p124 = por %p122, %p123
      %p125 = scmp.ne.s32.totalorder %s117, %s120
      %p126 = scmp.eq.s32.totalorder %s29, 0
      %p127 = por %p125, %p126
      %p128 = scmp.ne.s32.totalorder %s117, %s120
      %p129 = scmp.eq.s32.totalorder %s34, 1
      %p130 = por %p128, %p129
      %p131 = scmp.ne.s32.totalorder %s120, %s121
      %p132 = scmp.eq.s32.totalorder %s34, 0
      %p133 = por %p131, %p132
      %p134 = scmp.ne.s32.totalorder %s120, %s121
      %p135 = scmp.eq.s32.totalorder %s35, 1
      %p136 = por %p134, %p135
      %p138 = scmp.ne.s32.totalorder %s121, %s137
      %p139 = scmp.eq.s32.totalorder %s35, 0
      %p140 = por %p138, %p139
      %s142 = sadd.s32 %s141, 1
      %p145 = scmp.eq.s32.totalorder %s29, 1
      %p146 = scmp.ne.s32.totalorder %s141, %s143
      %p147 = scmp.eq.s32.totalorder %s29, 0
      %p148 = por %p146, %p147
      %p149 = scmp.ne.s32.totalorder %s141, %s143
      %p150 = scmp.eq.s32.totalorder %s34, 1
      %p151 = por %p149, %p150
      %p152 = scmp.ne.s32.totalorder %s143, %s144
      %p153 = scmp.eq.s32.totalorder %s34, 0
      %p154 = por %p152, %p153
      %p155 = scmp.ne.s32.totalorder %s143, %s144
      %p156 = scmp.eq.s32.totalorder %s35, 1
      %p157 = por %p155, %p156
      %p159 = scmp.ne.s32.totalorder %s144, %s158
      %p160 = scmp.eq.s32.totalorder %s35, 0
      %p161 = por %p159, %p160
      %s163 = sadd.s32 %s162, 1
      %p166 = scmp.eq.s32.totalorder %s29, 1
      %p167 = scmp.ne.s32.totalorder %s162, %s164
      %p168 = scmp.eq.s32.totalorder %s29, 0
      %p169 = por %p167, %p168
      %p170 = scmp.ne.s32.totalorder %s162, %s164
      %p171 = scmp.eq.s32.totalorder %s34, 1
      %p172 = por %p170, %p171
      %p173 = scmp.ne.s32.totalorder %s164, %s165
      %p174 = scmp.eq.s32.totalorder %s34, 0
      %p175 = por %p173, %p174
      %p176 = scmp.ne.s32.totalorder %s164, %s165
      %p177 = scmp.eq.s32.totalorder %s35, 1
      %p178 = por %p176, %p177
      %p180 = scmp.ne.s32.totalorder %s165, %s179
      %p181 = scmp.eq.s32.totalorder %s35, 0
      %p182 = por %p180, %p181
      %s184 = sadd.s32 %s183, 1
      %p187 = scmp.eq.s32.totalorder %s29, 1
      %p188 = scmp.ne.s32.totalorder %s183, %s185
      %p189 = scmp.eq.s32.totalorder %s29, 0
      %p190 = por %p188, %p189
      %p191 = scmp.ne.s32.totalorder %s183, %s185
      %p192 = scmp.eq.s32.totalorder %s34, 1
      %p193 = por %p191, %p192
      %p194 = scmp.ne.s32.totalorder %s185, %s186
      %p195 = scmp.eq.s32.totalorder %s34, 0
      %p196 = por %p194, %p195
      %p197 = scmp.ne.s32.totalorder %s185, %s186
      %p198 = scmp.eq.s32.totalorder %s35, 1
      %p199 = por %p197, %p198
      %p201 = scmp.ne.s32.totalorder %s186, %s200
      %p202 = scmp.eq.s32.totalorder %s35, 0
      %p203 = por %p201, %p202
      %s205 = sadd.s32 %s204, 1
      %p208 = scmp.eq.s32.totalorder %s29, 1
      %p209 = scmp.ne.s32.totalorder %s204, %s206
      %p210 = scmp.eq.s32.totalorder %s29, 0
      %p211 = por %p209, %p210
      %p212 = scmp.ne.s32.totalorder %s204, %s206
      %p213 = scmp.eq.s32.totalorder %s34, 1
      %p214 = por %p212, %p213
      %p215 = scmp.ne.s32.totalorder %s206, %s207
      %p216 = scmp.eq.s32.totalorder %s34, 0
      %p217 = por %p215, %p216
      %p218 = scmp.ne.s32.totalorder %s206, %s207
      %p219 = scmp.eq.s32.totalorder %s35, 1
      %p220 = por %p218, %p219
      %p222 = scmp.ne.s32.totalorder %s207, %s221
      %p223 = scmp.eq.s32.totalorder %s35, 0
      %p224 = por %p222, %p223
      %s226 = sadd.s32 %s225, 1
      %p229 = scmp.eq.s32.totalorder %s29, 1
      %p230 = scmp.ne.s32.totalorder %s225, %s227
      %p231 = scmp.eq.s32.totalorder %s29, 0
      %p232 = por %p230, %p231
      %p233 = scmp.ne.s32.totalorder %s225, %s227
      %p234 = scmp.eq.s32.totalorder %s34, 1
      %p235 = por %p233, %p234
      %p236 = scmp.ne.s32.totalorder %s227, %s228
      %p237 = scmp.eq.s32.totalorder %s34, 0
      %p238 = por %p236, %p237
      %p239 = scmp.ne.s32.totalorder %s227, %s228
      %p240 = scmp.eq.s32.totalorder %s35, 1
      %p241 = por %p239, %p240
      %p243 = scmp.ne.s32.totalorder %s228, %s242
      %p244 = scmp.eq.s32.totalorder %s35, 0
      %p245 = por %p243, %p244
      %s247 = sadd.s32 %s246, 1
      %p250 = scmp.eq.s32.totalorder %s29, 1
      %p251 = scmp.ne.s32.totalorder %s246, %s248
      %p252 = scmp.eq.s32.totalorder %s29, 0
      %p253 = por %p251, %p252
      %p254 = scmp.ne.s32.totalorder %s246, %s248
      %p255 = scmp.eq.s32.totalorder %s34, 1
      %p256 = por %p254, %p255
      %p257 = scmp.ne.s32.totalorder %s248, %s249
      %p258 = scmp.eq.s32.totalorder %s34, 0
      %p259 = por %p257, %p258
      %p260 = scmp.ne.s32.totalorder %s248, %s249
      %p261 = scmp.eq.s32.totalorder %s35, 1
      %p262 = por %p260, %p261
      %p264 = scmp.ne.s32.totalorder %s249, %s263
      %p265 = scmp.eq.s32.totalorder %s35, 0
      %p266 = por %p264, %p265
      %s268 = sadd.s32 %s267, 1
      %p271 = scmp.eq.s32.totalorder %s29, 1
      %p272 = scmp.ne.s32.totalorder %s267, %s269
      %p273 = scmp.eq.s32.totalorder %s29, 0
      %p274 = por %p272, %p273
      %p275 = scmp.ne.s32.totalorder %s267, %s269
      %p276 = scmp.eq.s32.totalorder %s34, 1
      %p277 = por %p275, %p276
      %p278 = scmp.ne.s32.totalorder %s269, %s270
      %p279 = scmp.eq.s32.totalorder %s34, 0
      %p280 = por %p278, %p279
      %p281 = scmp.ne.s32.totalorder %s269, %s270
      %p282 = scmp.eq.s32.totalorder %s35, 1
      %p283 = por %p281, %p282
      %p285 = scmp.ne.s32.totalorder %s270, %s284
      %p286 = scmp.eq.s32.totalorder %s35, 0
      %p287 = por %p285, %p286
      %s289 = sadd.s32 %s288, 1
      %p292 = scmp.eq.s32.totalorder %s29, 1
      %p293 = scmp.ne.s32.totalorder %s288, %s290
      %p294 = scmp.eq.s32.totalorder %s29, 0
      %p295 = por %p293, %p294
      %p296 = scmp.ne.s32.totalorder %s288, %s290
      %p297 = scmp.eq.s32.totalorder %s34, 1
      %p298 = por %p296, %p297
      %p299 = scmp.ne.s32.totalorder %s290, %s291
      %p300 = scmp.eq.s32.totalorder %s34, 0
      %p301 = por %p299, %p300
      %p302 = scmp.ne.s32.totalorder %s290, %s291
      %p303 = scmp.eq.s32.totalorder %s35, 1
      %p304 = por %p302, %p303
      %p306 = scmp.ne.s32.totalorder %s291, %s305
      %p307 = scmp.eq.s32.totalorder %s35, 0
      %p308 = por %p306, %p307
      %s310 = sadd.s32 %s309, 1
      %p313 = scmp.eq.s32.totalorder %s29, 1
      %p314 = scmp.ne.s32.totalorder %s309, %s311
      %p315 = scmp.eq.s32.totalorder %s29, 0
      %p316 = por %p314, %p315
      %p317 = scmp.ne.s32.totalorder %s309, %s311
      %p318 = scmp.eq.s32.totalorder %s34, 1
      %p319 = por %p317, %p318
      %p320 = scmp.ne.s32.totalorder %s311, %s312
      %p321 = scmp.eq.s32.totalorder %s34, 0
      %p322 = por %p320, %p321
      %p323 = scmp.ne.s32.totalorder %s311, %s312
      %p324 = scmp.eq.s32.totalorder %s35, 1
      %p325 = por %p323, %p324
      %p327 = scmp.ne.s32.totalorder %s312, %s326
      %p328 = scmp.eq.s32.totalorder %s35, 0
      %p329 = por %p327, %p328
      %s331 = sadd.s32 %s330, 1
      %p334 = scmp.eq.s32.totalorder %s29, 1
      %p335 = scmp.ne.s32.totalorder %s330, %s332
      %p336 = scmp.eq.s32.totalorder %s29, 0
      %p337 = por %p335, %p336
      %p338 = scmp.ne.s32.totalorder %s330, %s332
      %p339 = scmp.eq.s32.totalorder %s34, 1
      %p340 = por %p338, %p339
      %p341 = scmp.ne.s32.totalorder %s332, %s333
      %p342 = scmp.eq.s32.totalorder %s34, 0
      %p343 = por %p341, %p342
      %p344 = scmp.ne.s32.totalorder %s332, %s333
      %p345 = scmp.eq.s32.totalorder %s35, 1
      %p346 = por %p344, %p345
      %p348 = scmp.ne.s32.totalorder %s333, %s347
      %p349 = scmp.eq.s32.totalorder %s35, 0
      %p350 = por %p348, %p349
      %s352 = sadd.s32 %s351, 1
      %p355 = scmp.eq.s32.totalorder %s29, 1
      %p356 = scmp.ne.s32.totalorder %s351, %s353
      %p357 = scmp.eq.s32.totalorder %s29, 0
      %p358 = por %p356, %p357
      %p359 = scmp.ne.s32.totalorder %s351, %s353
      %p360 = scmp.eq.s32.totalorder %s34, 1
      %p361 = por %p359, %p360
      %p362 = scmp.ne.s32.totalorder %s353, %s354
      %p363 = scmp.eq.s32.totalorder %s34, 0
      %p364 = por %p362, %p363
      %p365 = scmp.ne.s32.totalorder %s353, %s354
      %p366 = scmp.eq.s32.totalorder %s35, 1
      %p367 = por %p365, %p366
      %p369 = scmp.ne.s32.totalorder %s354, %s368
      %p370 = scmp.eq.s32.totalorder %s35, 0
      %p371 = por %p369, %p370
      %s373 = sadd.s32 %s372, 1
      %p376 = scmp.eq.s32.totalorder %s29, 1
      %p377 = scmp.ne.s32.totalorder %s372, %s374
      %p378 = scmp.eq.s32.totalorder %s29, 0
      %p379 = por %p377, %p378
      %p380 = scmp.ne.s32.totalorder %s372, %s374
      %p381 = scmp.eq.s32.totalorder %s34, 1
      %p382 = por %p380, %p381
      %p383 = scmp.ne.s32.totalorder %s374, %s375
      %p384 = scmp.eq.s32.totalorder %s34, 0
      %p385 = por %p383, %p384
      %p386 = scmp.ne.s32.totalorder %s374, %s375
      %p387 = scmp.eq.s32.totalorder %s35, 1
      %p388 = por %p386, %p387
      %p390 = scmp.ne.s32.totalorder %s375, %s389
      %p391 = scmp.eq.s32.totalorder %s35, 0
      %p392 = por %p390, %p391
      %s394 = sadd.s32 %s393, 1
      %p397 = scmp.eq.s32.totalorder %s29, 1
      %p398 = scmp.ne.s32.totalorder %s393, %s395
      %p399 = scmp.eq.s32.totalorder %s29, 0
      %p400 = por %p398, %p399
      %p401 = scmp.ne.s32.totalorder %s393, %s395
      %p402 = scmp.eq.s32.totalorder %s34, 1
      %p403 = por %p401, %p402
      %p404 = scmp.ne.s32.totalorder %s395, %s396
      %p405 = scmp.eq.s32.totalorder %s34, 0
      %p406 = por %p404, %p405
      %p407 = scmp.ne.s32.totalorder %s395, %s396
      %p408 = scmp.eq.s32.totalorder %s35, 1
      %p409 = por %p407, %p408
      %p411 = scmp.ne.s32.totalorder %s396, %s410
      %p412 = scmp.eq.s32.totalorder %s35, 0
      %p413 = por %p411, %p412
      %s415 = sadd.s32 %s414, 1
      %p418 = scmp.eq.s32.totalorder %s29, 1
      %p419 = scmp.ne.s32.totalorder %s414, %s416
      %p420 = scmp.eq.s32.totalorder %s29, 0
      %p421 = por %p419, %p420
      %p422 = scmp.ne.s32.totalorder %s414, %s416
      %p423 = scmp.eq.s32.totalorder %s34, 1
      %p424 = por %p422, %p423
      %p425 = scmp.ne.s32.totalorder %s416, %s417
      %p426 = scmp.eq.s32.totalorder %s34, 0
      %p427 = por %p425, %p426
      %p428 = scmp.ne.s32.totalorder %s416, %s417
      %p429 = scmp.eq.s32.totalorder %s35, 1
      %p430 = por %p428, %p429
      %p432 = scmp.ne.s32.totalorder %s417, %s431
      %p433 = scmp.eq.s32.totalorder %s35, 0
      %p434 = por %p432, %p433
      %s436 = sadd.s32 %s435, 1
      %p439 = scmp.eq.s32.totalorder %s29, 1
      %p440 = scmp.ne.s32.totalorder %s435, %s437
      %p441 = scmp.eq.s32.totalorder %s29, 0
      %p442 = por %p440, %p441
      %p443 = scmp.ne.s32.totalorder %s435, %s437
      %p444 = scmp.eq.s32.totalorder %s34, 1
      %p445 = por %p443, %p444
      %p446 = scmp.ne.s32.totalorder %s437, %s438
      %p447 = scmp.eq.s32.totalorder %s34, 0
      %p448 = por %p446, %p447
      %p449 = scmp.ne.s32.totalorder %s437, %s438
      %p450 = scmp.eq.s32.totalorder %s35, 1
      %p451 = por %p449, %p450
      %p453 = scmp.ne.s32.totalorder %s438, %s452
      %p454 = scmp.eq.s32.totalorder %s35, 0
      %p455 = por %p453, %p454
      %s457 = sadd.s32 %s456, 1
      %p460 = scmp.eq.s32.totalorder %s29, 1
      %p461 = scmp.ne.s32.totalorder %s456, %s458
      %p462 = scmp.eq.s32.totalorder %s29, 0
      %p463 = por %p461, %p462
      %p464 = scmp.ne.s32.totalorder %s456, %s458
      %p465 = scmp.eq.s32.totalorder %s34, 1
      %p466 = por %p464, %p465
      %p467 = scmp.ne.s32.totalorder %s458, %s459
      %p468 = scmp.eq.s32.totalorder %s34, 0
      %p469 = por %p467, %p468
      %p470 = scmp.ne.s32.totalorder %s458, %s459
      %p471 = scmp.eq.s32.totalorder %s35, 1
      %p472 = por %p470, %p471
      %p474 = scmp.ne.s32.totalorder %s459, %s473
      %p475 = scmp.eq.s32.totalorder %s35, 0
      %p476 = por %p474, %p475
      %s477 = ssub.s32 %s29, %s36
      %p478 = scmp.eq.s32.totalorder %s477, 0
      %s480 = sadd.s32 %s479, 1
      %s481 = scalar_select %p478, %s479, %s480
      %p484 = pneg %p478
      %p485 = scmp.eq.s32.totalorder %s29, 1
      %p486 = por %p484, %p485
      %p487 = scmp.ne.s32.totalorder %s479, %s482
      %p488 = scmp.eq.s32.totalorder %s29, 0
      %p489 = por %p487, %p488
      %p490 = scmp.ne.s32.totalorder %s479, %s482
      %p491 = scmp.eq.s32.totalorder %s34, 1
      %p492 = por %p490, %p491
      %p493 = scmp.ne.s32.totalorder %s482, %s483
      %p494 = scmp.eq.s32.totalorder %s34, 0
      %p495 = por %p493, %p494
      %p496 = scmp.ne.s32.totalorder %s482, %s483
      %p497 = scmp.eq.s32.totalorder %s35, 1
      %p498 = por %p496, %p497
      %p500 = scmp.ne.s32.totalorder %s483, %s499
      %p501 = scmp.eq.s32.totalorder %s35, 0
      %p502 = por %p500, %p501
      %p503 = scmp.le.s32.totalorder 1, %s29
      %p504 = scmp.lt.s32.totalorder %s29, 3
      %p505 = pnand %p503, %p504
      %p506 = pneg %p505
      // Predicated region
      $region9: #{tpu_custom_call.1} parent=5 // pred_check
        _
      $region10: #{tpu_custom_call.1} parent=5 // pred_check_branch
        %508 = sbr.rel (%p505) target = $region12
      $region11: #{tpu_custom_call.1} parent=5 // pred_region
        %s509 = ssub.s32 %s29, 1
        // Predicated region
        $region13: #{tpu_custom_call.1} parent=11 // pred_check
          %p510 = pneg %p154
        $region14: #{tpu_custom_call.1} parent=11 // pred_check_branch
          %512 = sbr.rel (%p510) target = $region16
        $region15: #{tpu_custom_call.1} parent=11 // pred_region
          _
        $region16: #{tpu_custom_call.1} parent=11 // pred_fallthru
          _
        // Predicated region
        $region17: #{tpu_custom_call.1} parent=11 // pred_check
          %p513 = pneg %p175
        $region18: #{tpu_custom_call.1} parent=11 // pred_check_branch
          %515 = sbr.rel (%p513) target = $region20
        $region19: #{tpu_custom_call.1} parent=11 // pred_region
          _
        $region20: #{tpu_custom_call.1} parent=11 // pred_fallthru
          _
        // Predicated region
        $region21: #{tpu_custom_call.1} parent=11 // pred_check
          %p516 = pneg %p196
        $region22: #{tpu_custom_call.1} parent=11 // pred_check_branch
          %518 = sbr.rel (%p516) target = $region24
        $region23: #{tpu_custom_call.1} parent=11 // pred_region
          _
        $region24: #{tpu_custom_call.1} parent=11 // pred_fallthru
          _
        // Predicated region
        $region25: #{tpu_custom_call.1} parent=11 // pred_check
          %p519 = pneg %p217
        $region26: #{tpu_custom_call.1} parent=11 // pred_check_branch
          %521 = sbr.rel (%p519) target = $region28
        $region27: #{tpu_custom_call.1} parent=11 // pred_region
          _
        $region28: #{tpu_custom_call.1} parent=11 // pred_fallthru
          _
        // Predicated region
        $region29: #{tpu_custom_call.1} parent=11 // pred_check
          %p522 = pneg %p238
        $region30: #{tpu_custom_call.1} parent=11 // pred_check_branch
          %524 = sbr.rel (%p522) target = $region32
        $region31: #{tpu_custom_call.1} parent=11 // pred_region
          _
        $region32: #{tpu_custom_call.1} parent=11 // pred_fallthru
          _
        // Predicated region
        $region33: #{tpu_custom_call.1} parent=11 // pred_check
          %p525 = pneg %p259
        $region34: #{tpu_custom_call.1} parent=11 // pred_check_branch
          %527 = sbr.rel (%p525) target = $region36
        $region35: #{tpu_custom_call.1} parent=11 // pred_region
          _
        $region36: #{tpu_custom_call.1} parent=11 // pred_fallthru
          _
        // Predicated region
        $region37: #{tpu_custom_call.1} parent=11 // pred_check
          %p528 = pneg %p280
        $region38: #{tpu_custom_call.1} parent=11 // pred_check_branch
          %530 = sbr.rel (%p528) target = $region40
        $region39: #{tpu_custom_call.1} parent=11 // pred_region
          _
        $region40: #{tpu_custom_call.1} parent=11 // pred_fallthru
          _
        // Predicated region
        $region41: #{tpu_custom_call.1} parent=11 // pred_check
          %p531 = pneg %p301
        $region42: #{tpu_custom_call.1} parent=11 // pred_check_branch
          %533 = sbr.rel (%p531) target = $region44
        $region43: #{tpu_custom_call.1} parent=11 // pred_region
          _
        $region44: #{tpu_custom_call.1} parent=11 // pred_fallthru
          _
        // Predicated region
        $region45: #{tpu_custom_call.1} parent=11 // pred_check
          %p534 = pneg %p322
        $region46: #{tpu_custom_call.1} parent=11 // pred_check_branch
          %536 = sbr.rel (%p534) target = $region48
        $region47: #{tpu_custom_call.1} parent=11 // pred_region
          _
        $region48: #{tpu_custom_call.1} parent=11 // pred_fallthru
          _
        // Predicated region
        $region49: #{tpu_custom_call.1} parent=11 // pred_check
          %p537 = pneg %p343
        $region50: #{tpu_custom_call.1} parent=11 // pred_check_branch
          %539 = sbr.rel (%p537) target = $region52
        $region51: #{tpu_custom_call.1} parent=11 // pred_region
          _
        $region52: #{tpu_custom_call.1} parent=11 // pred_fallthru
          _
        // Predicated region
        $region53: #{tpu_custom_call.1} parent=11 // pred_check
          %p540 = pneg %p364
        $region54: #{tpu_custom_call.1} parent=11 // pred_check_branch
          %542 = sbr.rel (%p540) target = $region56
        $region55: #{tpu_custom_call.1} parent=11 // pred_region
          _
        $region56: #{tpu_custom_call.1} parent=11 // pred_fallthru
          _
        // Predicated region
        $region57: #{tpu_custom_call.1} parent=11 // pred_check
          %p543 = pneg %p385
        $region58: #{tpu_custom_call.1} parent=11 // pred_check_branch
          %545 = sbr.rel (%p543) target = $region60
        $region59: #{tpu_custom_call.1} parent=11 // pred_region
          _
        $region60: #{tpu_custom_call.1} parent=11 // pred_fallthru
          _
        // Predicated region
        $region61: #{tpu_custom_call.1} parent=11 // pred_check
          %p546 = pneg %p406
        $region62: #{tpu_custom_call.1} parent=11 // pred_check_branch
          %548 = sbr.rel (%p546) target = $region64
        $region63: #{tpu_custom_call.1} parent=11 // pred_region
          _
        $region64: #{tpu_custom_call.1} parent=11 // pred_fallthru
          _
        // Predicated region
        $region65: #{tpu_custom_call.1} parent=11 // pred_check
          %p549 = pneg %p427
        $region66: #{tpu_custom_call.1} parent=11 // pred_check_branch
          %551 = sbr.rel (%p549) target = $region68
        $region67: #{tpu_custom_call.1} parent=11 // pred_region
          _
        $region68: #{tpu_custom_call.1} parent=11 // pred_fallthru
          _
        // Predicated region
        $region69: #{tpu_custom_call.1} parent=11 // pred_check
          %p552 = pneg %p448
        $region70: #{tpu_custom_call.1} parent=11 // pred_check_branch
          %554 = sbr.rel (%p552) target = $region72
        $region71: #{tpu_custom_call.1} parent=11 // pred_region
          _
        $region72: #{tpu_custom_call.1} parent=11 // pred_fallthru
          _
        // Predicated region
        $region73: #{tpu_custom_call.1} parent=11 // pred_check
          %p555 = pneg %p469
        $region74: #{tpu_custom_call.1} parent=11 // pred_check_branch
          %557 = sbr.rel (%p555) target = $region76
        $region75: #{tpu_custom_call.1} parent=11 // pred_region
          _
        $region76: #{tpu_custom_call.1} parent=11 // pred_fallthru
          _
      $region12: #{tpu_custom_call.1} parent=5 // pred_fallthru
        _
      %p558 = scmp.lt.s32.totalorder %s29, 2
      // Predicated region
      $region77: #{tpu_custom_call.1} parent=5 // pred_check
        %p559 = pneg %p558
      $region78: #{tpu_custom_call.1} parent=5 // pred_check_branch
        %561 = sbr.rel (%p559) target = $region80
      $region79: #{tpu_custom_call.1} parent=5 // pred_region
        // Predicated region
        $region81: #{tpu_custom_call.1} parent=79 // pred_check
          %p562 = pneg %p49
        $region82: #{tpu_custom_call.1} parent=79 // pred_check_branch
          %564 = sbr.rel (%p562) target = $region84
        $region83: #{tpu_custom_call.1} parent=79 // pred_region
          %p565 = scmp.lt.s32.totalorder %s29, 1
          %s566 = scalar_select %p565, %s29, 1
          %s567 = smul.addr %s566, 8
          %s568 = scalar_lea.vmem %s0, %s567
        $region84: #{tpu_custom_call.1} parent=79 // pred_fallthru
          _
        // Predicated region
        $region85: #{tpu_custom_call.1} parent=79 // pred_check
          %p569 = pneg %p75
        $region86: #{tpu_custom_call.1} parent=79 // pred_check_branch
          %571 = sbr.rel (%p569) target = $region88
        $region87: #{tpu_custom_call.1} parent=79 // pred_region
          %p572 = scmp.lt.s32.totalorder %s29, 1
          %s573 = scalar_select %p572, %s29, 1
          %s574 = smul.addr %s573, 2
          %s575 = smul.addr %s574, 8
          %s576 = scalar_lea.vmem %s1, %s575
        $region88: #{tpu_custom_call.1} parent=79 // pred_fallthru
          _
        // Predicated region
        $region89: #{tpu_custom_call.1} parent=79 // pred_check
          %p577 = pneg %p101
        $region90: #{tpu_custom_call.1} parent=79 // pred_check_branch
          %579 = sbr.rel (%p577) target = $region92
        $region91: #{tpu_custom_call.1} parent=79 // pred_region
          %p580 = scmp.lt.s32.totalorder %s29, 1
          %s581 = scalar_select %p580, %s29, 1
          %s582 = scalar_lea.vmem %s2, %s581
        $region92: #{tpu_custom_call.1} parent=79 // pred_fallthru
          _
        // Predicated region
        $region93: #{tpu_custom_call.1} parent=79 // pred_check
          %p583 = pneg %p127
        $region94: #{tpu_custom_call.1} parent=79 // pred_check_branch
          %585 = sbr.rel (%p583) target = $region96
        $region95: #{tpu_custom_call.1} parent=79 // pred_region
          %p586 = scmp.lt.s32.totalorder %s29, 1
          %s587 = scalar_select %p586, %s29, 1
          %s588 = scalar_lea.vmem %s3, %s587
        $region96: #{tpu_custom_call.1} parent=79 // pred_fallthru
          _
      $region80: #{tpu_custom_call.1} parent=5 // pred_fallthru
        _
      %p589 = scmp.le.s32.totalorder 1, %s29
      %p590 = scmp.lt.s32.totalorder %s29, 3
      %p591 = pnand %p589, %p590
      %p592 = pneg %p591
      // Predicated region
      $region97: #{tpu_custom_call.1} parent=5 // pred_check
        _
      $region98: #{tpu_custom_call.1} parent=5 // pred_check_branch
        %594 = sbr.rel (%p591) target = $region100
      $region99: #{tpu_custom_call.1} parent=5 // pred_region
        %s595 = ssub.s32 %s29, 1
        %p596 = scmp.lt.s32.totalorder %s34, 1
        %s597 = scalar_select %p596, %s34, 1
        %s598 = smul.addr %s597, 8
        %s599 = scalar_lea.vmem %s0, %s598
        %p600 = pneg %p55
        %p601 = pneg %p52
        %p602 = scmp.lt.s32.totalorder %s34, 1
        %s603 = scalar_select %p602, %s34, 1
        %s604 = smul.addr %s603, 2
        %s605 = smul.addr %s604, 8
        %s606 = scalar_lea.vmem %s1, %s605
        %p607 = pneg %p81
        %p608 = pneg %p78
        %p609 = scmp.lt.s32.totalorder %s34, 1
        %s610 = scalar_select %p609, %s34, 1
        %s611 = scalar_lea.vmem %s2, %s610
        %p612 = pneg %p107
        %p613 = pneg %p104
        %p614 = scmp.lt.s32.totalorder %s34, 1
        %s615 = scalar_select %p614, %s34, 1
        %s616 = scalar_lea.vmem %s3, %s615
        %p617 = pneg %p133
        %p618 = pneg %p130
        %p619 = pneg %p154
        %p620 = pneg %p151
        %p621 = pneg %p175
        %p622 = pneg %p172
        %p623 = pneg %p196
        %p624 = pneg %p193
        %p625 = pneg %p217
        %p626 = pneg %p214
        %p627 = pneg %p238
        %p628 = pneg %p235
        %p629 = pneg %p259
        %p630 = pneg %p256
        %p631 = pneg %p280
        %p632 = pneg %p277
        %p633 = pneg %p301
        %p634 = pneg %p298
        %p635 = pneg %p322
        %p636 = pneg %p319
        %p637 = pneg %p343
        %p638 = pneg %p340
        %p639 = pneg %p364
        %p640 = pneg %p361
        %p641 = pneg %p385
        %p642 = pneg %p382
        %p643 = pneg %p406
        %p644 = pneg %p403
        %p645 = pneg %p427
        %p646 = pneg %p424
        %p647 = pneg %p448
        %p648 = pneg %p445
        %p649 = pneg %p469
        %p650 = pneg %p466
        %p651 = pneg %p495
        %p652 = pneg %p492
        %s653 = sand.u32 %s482, 1
        %s654 = scalar_lea.sflag [#allocation3], %s653
        %s655 = sand.u32 %s482, 1
        %s656 = smul.addr %s655, 8
        %s657 = scalar_lea.vmem [#allocation2], %s656
        %p658 = scmp.lt.s32.totalorder %s34, 1
        %s659 = scalar_select %p658, %s34, 1
        %s660 = smul.addr %s659, 8
        %s661 = scalar_lea.vmem %s0, %s660
        %p662 = scmp.lt.s32.totalorder %s34, 1
        %s663 = scalar_select %p662, %s34, 1
        %s664 = smul.addr %s663, 2
        %s665 = smul.addr %s664, 8
        %s666 = scalar_lea.vmem %s1, %s665
        %p667 = scmp.lt.s32.totalorder %s34, 1
        %s668 = scalar_select %p667, %s34, 1
        %s669 = scalar_lea.vmem %s2, %s668
        %p670 = scmp.lt.s32.totalorder %s34, 1
        %s671 = scalar_select %p670, %s34, 1
        %s672 = scalar_lea.vmem %s3, %s671
        %v673 = vld [vmem:[%s4] sm:$0x3f]
        %v674 = vld [vmem:[%s19] sm:$0x3]
        %v675 = vld [vmem:[%s661] sm:$0xff]
        %vm676 = vcmask 326656
        %v677 = vsel %vm676, %v675, 0.0
        %678 = vadd.xlane.f32.xlu0 %v677
        %v679 = vpop.xlane.xlu0 %678
        %v680 = vrcp.pop 40.0
        %v681 = vmul.f32 %v679, %v680
        %v682 = vsub.f32 %v675, %v681
        %v683 = vmul.f32 %v682, %v682
        %v684 = vsel %vm676, %v683, 0.0
        %685 = vadd.xlane.f32.xlu0 %v684
        %v686 = vpop.xlane.xlu0 %685
        %v687 = vmul.f32 %v686, %v680
        %v688 = vadd.f32 %v687, 1e-06
        %v689 = vrsqrt.pop %v688
        %v690 = vmul.f32 %v682, %v689
        %v691 = vlaneseq
        %v692 = vshrl.u32 %v691, 7
        %v693 = vsub.s32 0, %v692
        %v694 = vrot.slane %v673, %v693
        %v695 = vmul.f32 %v690, %v694
        %v696 = vlaneseq
        %v697 = vshrl.u32 %v696, 7
        %v698 = vsub.s32 1, %v697
        %v699 = vrot.slane %v673, %v698
        %v700 = vadd.f32 %v695, %v699
        %v701 = vld [vmem:[%s5] sm:$0xff]
        %v702 = vld [vmem:[%s5 + $0x8] sm:$0xff]
        %v703 = vld [vmem:[%s5 + $0x10] sm:$0xff]
        %v704 = vld [vmem:[%s5 + $0x18] sm:$0xff]
        %v705 = vld [vmem:[%s5 + $0x20] sm:$0xff]
        %v706 = vld [vmem:[%s6] sm:$0x1]
        %v708 = vlaneseq
        %v709 = vshrl.u32 %v708, 7
        %v710 = vsub.s32 0, %v709
        %v711 = vrot.slane %v706, %v710
        %v714 = vsel %vm676, %v700, 0
        %716 = vmatprep.subr.mxu0 0.0
        %717 = vmatpush1.msra.mxu0 %v701
        %718 = vmatprep.subr.mxu0 0.0
        %719 = vmatpush1.msra.mxu0 %v702
        %720 = vmatprep.subr.mxu0 0.0
        %721 = vmatpush1.msra.mxu0 %v703
        %722 = vmatprep.subr.mxu0 0.0
        %723 = vmatpush1.msra.mxu0 %v704
        %724 = vmatprep.subr.mxu0 0.0
        %725 = vmatpush1.msra.mxu0 %v705
        %726 = vmatprep.subr.mxu0 0.0
        %727 = vmatpush1.msra.mxu0 0.0
        %728 = vmatprep.subr.mxu0 0.0
        %729 = vmatpush1.msra.mxu0 0.0
        %730 = vmatprep.subr.mxu0 0.0
        %731 = vmatpush1.msra.mxu0 0.0
        %732 = vmatprep.subr.mxu0 0.0
        %733 = vmatpush1.msra.mxu0 0.0
        %734 = vmatprep.subr.mxu0 0.0
        %735 = vmatpush1.msra.mxu0 0.0
        %736 = vmatprep.subr.mxu0 0.0
        %737 = vmatpush1.msra.mxu0 0.0
        %738 = vmatprep.subr.mxu0 0.0
        %739 = vmatpush1.msra.mxu0 0.0
        %740 = vmatprep.subr.mxu0 0.0
        %741 = vmatpush1.msra.mxu0 0.0
        %742 = vmatprep.subr.mxu0 0.0
        %743 = vmatpush1.msra.mxu0 0.0
        %744 = vmatprep.subr.mxu0 0.0
        %745 = vmatpush1.msra.mxu0 0.0
        %746 = vmatprep.subr.mxu0 0.0
        %747 = vmatpush1.msra.mxu0 0.0
        %748 = vmatprep.subr.mxu0 0.0
        %749 = vmatpush1.msra.mxu0 0.0
        %750 = vmatprep.subr.mxu0 0.0
        %751 = vmatpush1.msra.mxu0 0.0
        %752 = vmatprep.subr.mxu0 0.0
        %753 = vmatpush1.msra.mxu0 0.0
        %754 = vmatprep.subr.mxu0 0.0
        %755 = vmatpush1.msra.mxu0 0.0
        %756 = vmatprep.subr.mxu0 0.0
        %757 = vmatpush1.msra.mxu0 0.0
        %758 = vmatprep.subr.mxu0 0.0
        %759 = vmatpush1.msra.mxu0 0.0
        %760 = vmatprep.subr.mxu0 0.0
        %761 = vmatpush1.msra.mxu0 0.0
        %762 = vmatprep.subr.mxu0 0.0
        %763 = vmatpush1.msra.mxu0 0.0
        %764 = vmatprep.subr.mxu0 0.0
        %765 = vmatpush1.msra.mxu0 0.0
        %766 = vmatprep.subr.mxu0 0.0
        %767 = vmatpush1.msra.mxu0 0.0
        %768 = vmatprep.subr.mxu0 0.0
        %769 = vmatpush1.msra.mxu0 0.0
        %770 = vmatprep.subr.mxu0 0.0
        %771 = vmatpush1.msra.mxu0 0.0
        %772 = vmatprep.subr.mxu0 0.0
        %773 = vmatpush1.msra.mxu0 0.0
        %774 = vmatprep.subr.mxu0 0.0
        %775 = vmatpush1.msra.mxu0 0.0
        %776 = vmatprep.subr.mxu0 0.0
        %777 = vmatpush1.msra.mxu0 0.0
        %778 = vmatprep.subr.mxu0 0.0
        %779 = vmatpush1.msra.mxu0 0.0
        %780 = vmatprep.mubr.f32.mxu0 0.0
        %781 = vmatmul.mubr.f32.gmra.mrb[0].mxu0 %v714
        %v782 = vpop.f32.mrb[0].mxu0
        %v783 = vadd.f32 %v711, %v782
        %v784 = vpop.f32.mrb[0].mxu0
        %785 = vdwg.mxu0
        %v786 = vlaneseq
        %v787 = vshrl.u32 %v786, 7
        %v788 = vlaneseq
        %v789 = vand.u32 %v788, 127
        %vm790 = vcmp.le.s32.totalorder %v789, %v787
        %v791 = vld [vmem:[%s672] sm:$0x1]
        %vm792 = vcmp.ne.s32.totalorder %v791, 0
        %v793 = vsel %vm792, 1, 0
        %v794 = vlaneseq
        %v795 = vshrl.u32 %v794, 7
        %v796 = vsub.s32 0, %v795
        %v797 = vrot.slane %v793, %v796
        %vm798 = vcmp.eq.s32.totalorder %v797, 1
        %vm799 = vmand %vm790, %vm798
        %v800 = vmul.f32 %v783, 0.2236068
        %802 = vrot.lane.b32.xlu0 %v783, 88
        %v803 = vpop.permute.xlu0 %802
        %vm804 = vcmask 162816
        %v806 = vsel %vm804, %v800, 0
        %v808 = vsel %vm804, %v803, 0
        %810 = vmatprep.subr.mxu0 0.0
        %811 = vmatpush1.xpose.msra.mxu0 %v808
        %812 = vmatprep.subr.mxu0 0.0
        %813 = vmatpush1.xpose.msra.mxu0 0.0
        %814 = vmatprep.subr.mxu0 0.0
        %815 = vmatpush1.xpose.msra.mxu0 0.0
        %816 = vmatprep.subr.mxu0 0.0
        %817 = vmatpush1.xpose.msra.mxu0 0.0
        %818 = vmatprep.subr.mxu0 0.0
        %819 = vmatpush1.xpose.msra.mxu0 0.0
        %820 = vmatprep.subr.mxu0 0.0
        %821 = vmatpush1.xpose.msra.mxu0 0.0
        %822 = vmatprep.subr.mxu0 0.0
        %823 = vmatpush1.xpose.msra.mxu0 0.0
        %824 = vmatprep.subr.mxu0 0.0
        %825 = vmatpush1.xpose.msra.mxu0 0.0
        %826 = vmatprep.subr.mxu0 0.0
        %827 = vmatpush1.xpose.msra.mxu0 0.0
        %828 = vmatprep.subr.mxu0 0.0
        %829 = vmatpush1.xpose.msra.mxu0 0.0
        %830 = vmatprep.subr.mxu0 0.0
        %831 = vmatpush1.xpose.msra.mxu0 0.0
        %832 = vmatprep.subr.mxu0 0.0
        %833 = vmatpush1.xpose.msra.mxu0 0.0
        %834 = vmatprep.subr.mxu0 0.0
        %835 = vmatpush1.xpose.msra.mxu0 0.0
        %836 = vmatprep.subr.mxu0 0.0
        %837 = vmatpush1.xpose.msra.mxu0 0.0
        %838 = vmatprep.subr.mxu0 0.0
        %839 = vmatpush1.xpose.msra.mxu0 0.0
        %840 = vmatprep.subr.mxu0 0.0
        %841 = vmatpush1.xpose.msra.mxu0 0.0
        %842 = vmatprep.subr.mxu0 0.0
        %843 = vmatpush1.xpose.msra.mxu0 0.0
        %844 = vmatprep.subr.mxu0 0.0
        %845 = vmatpush1.xpose.msra.mxu0 0.0
        %846 = vmatprep.subr.mxu0 0.0
        %847 = vmatpush1.xpose.msra.mxu0 0.0
        %848 = vmatprep.subr.mxu0 0.0
        %849 = vmatpush1.xpose.msra.mxu0 0.0
        %850 = vmatprep.subr.mxu0 0.0
        %851 = vmatpush1.xpose.msra.mxu0 0.0
        %852 = vmatprep.subr.mxu0 0.0
        %853 = vmatpush1.xpose.msra.mxu0 0.0
        %854 = vmatprep.subr.mxu0 0.0
        %855 = vmatpush1.xpose.msra.mxu0 0.0
        %856 = vmatprep.subr.mxu0 0.0
        %857 = vmatpush1.xpose.msra.mxu0 0.0
        %858 = vmatprep.subr.mxu0 0.0
        %859 = vmatpush1.xpose.msra.mxu0 0.0
        %860 = vmatprep.subr.mxu0 0.0
        %861 = vmatpush1.xpose.msra.mxu0 0.0
        %862 = vmatprep.subr.mxu0 0.0
        %863 = vmatpush1.xpose.msra.mxu0 0.0
        %864 = vmatprep.subr.mxu0 0.0
        %865 = vmatpush1.xpose.msra.mxu0 0.0
        %866 = vmatprep.subr.mxu0 0.0
        %867 = vmatpush1.xpose.msra.mxu0 0.0
        %868 = vmatprep.subr.mxu0 0.0
        %869 = vmatpush1.xpose.msra.mxu0 0.0
        %870 = vmatprep.subr.mxu0 0.0
        %871 = vmatpush1.xpose.msra.mxu0 0.0
        %872 = vmatprep.subr.mxu0 0.0
        %873 = vmatpush1.xpose.msra.mxu0 0.0
        %874 = vmatprep.mubr.f32.mxu0 0.0
        %875 = vmatmul.mubr.f32.gmra.mrb[0].mxu0 %v806
        %v876 = vpop.f32.mrb[0].mxu0
        %v877 = vadd.f32 0.0, %v876
        %v878 = vpop.f32.mrb[0].mxu0
        %879 = vdwg.mxu0
        %v880 = vsel %vm799, %v877, -1e+09
        %vm881 = vcmask 64512
        %v882 = vsel %vm881, %v880, -inf
        %883 = vmax.xlane.f32.xlu0 %v882
        %v884 = vpop.xlane.xlu0 %883
        %v885 = vsub.f32 %v880, %v884
        %v886 = vmul.f32 %v885, 1.442695
        %v887 = vpow.pop %v886
        %v888 = vsel %vm881, %v887, 0.0
        %889 = vadd.xlane.f32.xlu0 %v888
        %v890 = vpop.xlane.xlu0 %889
        %v891 = vrcp.pop %v890
        %v892 = vmul.f32 %v887, %v891
        %893 = vrot.lane.b32.xlu0 %v783, 48
        %v894 = vpop.permute.xlu0 %893
        %v897 = vsel %vm881, %v892, 0
        %899 = vmatprep.subr.mxu0 0.0
        %900 = vmatpush1.msra.mxu0 %v894
        %901 = vmatprep.subr.mxu0 0.0
        %902 = vmatpush1.msra.mxu0 0.0
        %903 = vmatprep.subr.mxu0 0.0
        %904 = vmatpush1.msra.mxu0 0.0
        %905 = vmatprep.subr.mxu0 0.0
        %906 = vmatpush1.msra.mxu0 0.0
        %907 = vmatprep.subr.mxu0 0.0
        %908 = vmatpush1.msra.mxu0 0.0
        %909 = vmatprep.subr.mxu0 0.0
        %910 = vmatpush1.msra.mxu0 0.0
        %911 = vmatprep.subr.mxu0 0.0
        %912 = vmatpush1.msra.mxu0 0.0
        %913 = vmatprep.subr.mxu0 0.0
        %914 = vmatpush1.msra.mxu0 0.0
        %915 = vmatprep.subr.mxu0 0.0
        %916 = vmatpush1.msra.mxu0 0.0
        %917 = vmatprep.subr.mxu0 0.0
        %918 = vmatpush1.msra.mxu0 0.0
        %919 = vmatprep.subr.mxu0 0.0
        %920 = vmatpush1.msra.mxu0 0.0
        %921 = vmatprep.subr.mxu0 0.0
        %922 = vmatpush1.msra.mxu0 0.0
        %923 = vmatprep.subr.mxu0 0.0
        %924 = vmatpush1.msra.mxu0 0.0
        %925 = vmatprep.subr.mxu0 0.0
        %926 = vmatpush1.msra.mxu0 0.0
        %927 = vmatprep.subr.mxu0 0.0
        %928 = vmatpush1.msra.mxu0 0.0
        %929 = vmatprep.subr.mxu0 0.0
        %930 = vmatpush1.msra.mxu0 0.0
        %931 = vmatprep.subr.mxu0 0.0
        %932 = vmatpush1.msra.mxu0 0.0
        %933 = vmatprep.subr.mxu0 0.0
        %934 = vmatpush1.msra.mxu0 0.0
        %935 = vmatprep.subr.mxu0 0.0
        %936 = vmatpush1.msra.mxu0 0.0
        %937 = vmatprep.subr.mxu0 0.0
        %938 = vmatpush1.msra.mxu0 0.0
        %939 = vmatprep.subr.mxu0 0.0
        %940 = vmatpush1.msra.mxu0 0.0
        %941 = vmatprep.subr.mxu0 0.0
        %942 = vmatpush1.msra.mxu0 0.0
        %943 = vmatprep.subr.mxu0 0.0
        %944 = vmatpush1.msra.mxu0 0.0
        %945 = vmatprep.subr.mxu0 0.0
        %946 = vmatpush1.msra.mxu0 0.0
        %947 = vmatprep.subr.mxu0 0.0
        %948 = vmatpush1.msra.mxu0 0.0
        %949 = vmatprep.subr.mxu0 0.0
        %950 = vmatpush1.msra.mxu0 0.0
        %951 = vmatprep.subr.mxu0 0.0
        %952 = vmatpush1.msra.mxu0 0.0
        %953 = vmatprep.subr.mxu0 0.0
        %954 = vmatpush1.msra.mxu0 0.0
        %955 = vmatprep.subr.mxu0 0.0
        %956 = vmatpush1.msra.mxu0 0.0
        %957 = vmatprep.subr.mxu0 0.0
        %958 = vmatpush1.msra.mxu0 0.0
        %959 = vmatprep.subr.mxu0 0.0
        %960 = vmatpush1.msra.mxu0 0.0
        %961 = vmatprep.subr.mxu0 0.0
        %962 = vmatpush1.msra.mxu0 0.0
        %963 = vmatprep.mubr.f32.mxu0 0.0
        %964 = vmatmul.mubr.f32.gmra.mrb[0].mxu0 %v897
        %v965 = vpop.f32.mrb[0].mxu0
        %v966 = vadd.f32 0.0, %v965
        %v967 = vpop.f32.mrb[0].mxu0
        %968 = vdwg.mxu0
        %v969 = vld [vmem:[%s7] sm:$0xff]
        %v970 = vld [vmem:[%s7 + $0x8] sm:$0xff]
        %v971 = vld [vmem:[%s7 + $0x10] sm:$0xf]
        %972 = vrot.lane.b32.xlu0 %v800, 108
        %v973 = vpop.permute.xlu0 %972
        %974 = vrot.lane.b32.xlu0 %v783, 68
        %v975 = vpop.permute.xlu0 %974
        %v976 = vsel %vm804, %v973, 0
        %v978 = vsel %vm804, %v975, 0
        %980 = vmatprep.subr.mxu0 0.0
        %981 = vmatpush1.xpose.msra.mxu0 %v978
        %982 = vmatprep.subr.mxu0 0.0
        %983 = vmatpush1.xpose.msra.mxu0 0.0
        %984 = vmatprep.subr.mxu0 0.0
        %985 = vmatpush1.xpose.msra.mxu0 0.0
        %986 = vmatprep.subr.mxu0 0.0
        %987 = vmatpush1.xpose.msra.mxu0 0.0
        %988 = vmatprep.subr.mxu0 0.0
        %989 = vmatpush1.xpose.msra.mxu0 0.0
        %990 = vmatprep.subr.mxu0 0.0
        %991 = vmatpush1.xpose.msra.mxu0 0.0
        %992 = vmatprep.subr.mxu0 0.0
        %993 = vmatpush1.xpose.msra.mxu0 0.0
        %994 = vmatprep.subr.mxu0 0.0
        %995 = vmatpush1.xpose.msra.mxu0 0.0
        %996 = vmatprep.subr.mxu0 0.0
        %997 = vmatpush1.xpose.msra.mxu0 0.0
        %998 = vmatprep.subr.mxu0 0.0
        %999 = vmatpush1.xpose.msra.mxu0 0.0
        %1000 = vmatprep.subr.mxu0 0.0
        %1001 = vmatpush1.xpose.msra.mxu0 0.0
        %1002 = vmatprep.subr.mxu0 0.0
        %1003 = vmatpush1.xpose.msra.mxu0 0.0
        %1004 = vmatprep.subr.mxu0 0.0
        %1005 = vmatpush1.xpose.msra.mxu0 0.0
        %1006 = vmatprep.subr.mxu0 0.0
        %1007 = vmatpush1.xpose.msra.mxu0 0.0
        %1008 = vmatprep.subr.mxu0 0.0
        %1009 = vmatpush1.xpose.msra.mxu0 0.0
        %1010 = vmatprep.subr.mxu0 0.0
        %1011 = vmatpush1.xpose.msra.mxu0 0.0
        %1012 = vmatprep.subr.mxu0 0.0
        %1013 = vmatpush1.xpose.msra.mxu0 0.0
        %1014 = vmatprep.subr.mxu0 0.0
        %1015 = vmatpush1.xpose.msra.mxu0 0.0
        %1016 = vmatprep.subr.mxu0 0.0
        %1017 = vmatpush1.xpose.msra.mxu0 0.0
        %1018 = vmatprep.subr.mxu0 0.0
        %1019 = vmatpush1.xpose.msra.mxu0 0.0
        %1020 = vmatprep.subr.mxu0 0.0
        %1021 = vmatpush1.xpose.msra.mxu0 0.0
        %1022 = vmatprep.subr.mxu0 0.0
        %1023 = vmatpush1.xpose.msra.mxu0 0.0
        %1024 = vmatprep.subr.mxu0 0.0
        %1025 = vmatpush1.xpose.msra.mxu0 0.0
        %1026 = vmatprep.subr.mxu0 0.0
        %1027 = vmatpush1.xpose.msra.mxu0 0.0
        %1028 = vmatprep.subr.mxu0 0.0
        %1029 = vmatpush1.xpose.msra.mxu0 0.0
        %1030 = vmatprep.subr.mxu0 0.0
        %1031 = vmatpush1.xpose.msra.mxu0 0.0
        %1032 = vmatprep.subr.mxu0 0.0
        %1033 = vmatpush1.xpose.msra.mxu0 0.0
        %1034 = vmatprep.subr.mxu0 0.0
        %1035 = vmatpush1.xpose.msra.mxu0 0.0
        %1036 = vmatprep.subr.mxu0 0.0
        %1037 = vmatpush1.xpose.msra.mxu0 0.0
        %1038 = vmatprep.subr.mxu0 0.0
        %1039 = vmatpush1.xpose.msra.mxu0 0.0
        %1040 = vmatprep.subr.mxu0 0.0
        %1041 = vmatpush1.xpose.msra.mxu0 0.0
        %1042 = vmatprep.subr.mxu0 0.0
        %1043 = vmatpush1.xpose.msra.mxu0 0.0
        %1044 = vmatprep.mubr.f32.mxu0 0.0
        %1045 = vmatmul.mubr.f32.gmra.mrb[0].mxu0 %v976
        %v1046 = vpop.f32.mrb[0].mxu0
        %v1047 = vadd.f32 0.0, %v1046
        %v1048 = vpop.f32.mrb[0].mxu0
        %1049 = vdwg.mxu0
        %v1050 = vsel %vm799, %v1047, -1e+09
        %v1051 = vsel %vm881, %v1050, -inf
        %1052 = vmax.xlane.f32.xlu0 %v1051
        %v1053 = vpop.xlane.xlu0 %1052
        %v1054 = vsub.f32 %v1050, %v1053
        %v1055 = vmul.f32 %v1054, 1.442695
        %v1056 = vpow.pop %v1055
        %v1057 = vsel %vm881, %v1056, 0.0
        %1058 = vadd.xlane.f32.xlu0 %v1057
        %v1059 = vpop.xlane.xlu0 %1058
        %v1060 = vrcp.pop %v1059
        %v1061 = vmul.f32 %v1056, %v1060
        %1062 = vrot.lane.b32.xlu0 %v783, 28
        %v1063 = vpop.permute.xlu0 %1062
        %v1066 = vsel %vm881, %v1061, 0
        %1068 = vmatprep.subr.mxu0 0.0
        %1069 = vmatpush1.msra.mxu0 %v1063
        %1070 = vmatprep.subr.mxu0 0.0
        %1071 = vmatpush1.msra.mxu0 0.0
        %1072 = vmatprep.subr.mxu0 0.0
        %1073 = vmatpush1.msra.mxu0 0.0
        %1074 = vmatprep.subr.mxu0 0.0
        %1075 = vmatpush1.msra.mxu0 0.0
        %1076 = vmatprep.subr.mxu0 0.0
        %1077 = vmatpush1.msra.mxu0 0.0
        %1078 = vmatprep.subr.mxu0 0.0
        %1079 = vmatpush1.msra.mxu0 0.0
        %1080 = vmatprep.subr.mxu0 0.0
        %1081 = vmatpush1.msra.mxu0 0.0
        %1082 = vmatprep.subr.mxu0 0.0
        %1083 = vmatpush1.msra.mxu0 0.0
        %1084 = vmatprep.subr.mxu0 0.0
        %1085 = vmatpush1.msra.mxu0 0.0
        %1086 = vmatprep.subr.mxu0 0.0
        %1087 = vmatpush1.msra.mxu0 0.0
        %1088 = vmatprep.subr.mxu0 0.0
        %1089 = vmatpush1.msra.mxu0 0.0
        %1090 = vmatprep.subr.mxu0 0.0
        %1091 = vmatpush1.msra.mxu0 0.0
        %1092 = vmatprep.subr.mxu0 0.0
        %1093 = vmatpush1.msra.mxu0 0.0
        %1094 = vmatprep.subr.mxu0 0.0
        %1095 = vmatpush1.msra.mxu0 0.0
        %1096 = vmatprep.subr.mxu0 0.0
        %1097 = vmatpush1.msra.mxu0 0.0
        %1098 = vmatprep.subr.mxu0 0.0
        %1099 = vmatpush1.msra.mxu0 0.0
        %1100 = vmatprep.subr.mxu0 0.0
        %1101 = vmatpush1.msra.mxu0 0.0
        %1102 = vmatprep.subr.mxu0 0.0
        %1103 = vmatpush1.msra.mxu0 0.0
        %1104 = vmatprep.subr.mxu0 0.0
        %1105 = vmatpush1.msra.mxu0 0.0
        %1106 = vmatprep.subr.mxu0 0.0
        %1107 = vmatpush1.msra.mxu0 0.0
        %1108 = vmatprep.subr.mxu0 0.0
        %1109 = vmatpush1.msra.mxu0 0.0
        %1110 = vmatprep.subr.mxu0 0.0
        %1111 = vmatpush1.msra.mxu0 0.0
        %1112 = vmatprep.subr.mxu0 0.0
        %1113 = vmatpush1.msra.mxu0 0.0
        %1114 = vmatprep.subr.mxu0 0.0
        %1115 = vmatpush1.msra.mxu0 0.0
        %1116 = vmatprep.subr.mxu0 0.0
        %1117 = vmatpush1.msra.mxu0 0.0
        %1118 = vmatprep.subr.mxu0 0.0
        %1119 = vmatpush1.msra.mxu0 0.0
        %1120 = vmatprep.subr.mxu0 0.0
        %1121 = vmatpush1.msra.mxu0 0.0
        %1122 = vmatprep.subr.mxu0 0.0
        %1123 = vmatpush1.msra.mxu0 0.0
        %1124 = vmatprep.subr.mxu0 0.0
        %1125 = vmatpush1.msra.mxu0 0.0
        %1126 = vmatprep.subr.mxu0 0.0
        %1127 = vmatpush1.msra.mxu0 0.0
        %1128 = vmatprep.subr.mxu0 0.0
        %1129 = vmatpush1.msra.mxu0 0.0
        %1130 = vmatprep.subr.mxu0 0.0
        %1131 = vmatpush1.msra.mxu0 0.0
        %1132 = vmatprep.mubr.f32.mxu0 0.0
        %1133 = vmatmul.mubr.f32.gmra.mrb[0].mxu0 %v1066
        %v1134 = vpop.f32.mrb[0].mxu0
        %v1135 = vadd.f32 0.0, %v1134
        %v1136 = vpop.f32.mrb[0].mxu0
        %1137 = vdwg.mxu0
        %s1138 = scalar_lea.vmem %s7, 24
        %v1139 = vld [vmem:[%s1138] sm:$0xff]
        %v1140 = vld [vmem:[%s1138 + $0x8] sm:$0xff]
        %v1141 = vld [vmem:[%s1138 + $0x10] sm:$0xf]
        %v1143 = vsel %vm804, %v1135, 0
        %vm1145 = vcmask 1043456
        %v1147 = vsel %vm1145, %v1141, 0
        %1149 = vmatprep.subr.mxu0 0.0
        %1150 = vmatpush1.msra.mxu0 %v1139
        %1151 = vmatprep.subr.mxu0 0.0
        %1152 = vmatpush1.msra.mxu0 %v1140
        %1153 = vmatprep.subr.mxu0 0.0
        %1154 = vmatpush1.msra.mxu0 %v1147
        %1155 = vmatprep.subr.mxu0 0.0
        %1156 = vmatpush1.msra.mxu0 0.0
        %1157 = vmatprep.subr.mxu0 0.0
        %1158 = vmatpush1.msra.mxu0 0.0
        %1159 = vmatprep.subr.mxu0 0.0
        %1160 = vmatpush1.msra.mxu0 0.0
        %1161 = vmatprep.subr.mxu0 0.0
        %1162 = vmatpush1.msra.mxu0 0.0
        %1163 = vmatprep.subr.mxu0 0.0
        %1164 = vmatpush1.msra.mxu0 0.0
        %1165 = vmatprep.subr.mxu0 0.0
        %1166 = vmatpush1.msra.mxu0 0.0
        %1167 = vmatprep.subr.mxu0 0.0
        %1168 = vmatpush1.msra.mxu0 0.0
        %1169 = vmatprep.subr.mxu0 0.0
        %1170 = vmatpush1.msra.mxu0 0.0
        %1171 = vmatprep.subr.mxu0 0.0
        %1172 = vmatpush1.msra.mxu0 0.0
        %1173 = vmatprep.subr.mxu0 0.0
        %1174 = vmatpush1.msra.mxu0 0.0
        %1175 = vmatprep.subr.mxu0 0.0
        %1176 = vmatpush1.msra.mxu0 0.0
        %1177 = vmatprep.subr.mxu0 0.0
        %1178 = vmatpush1.msra.mxu0 0.0
        %1179 = vmatprep.subr.mxu0 0.0
        %1180 = vmatpush1.msra.mxu0 0.0
        %1181 = vmatprep.subr.mxu0 0.0
        %1182 = vmatpush1.msra.mxu0 0.0
        %1183 = vmatprep.subr.mxu0 0.0
        %1184 = vmatpush1.msra.mxu0 0.0
        %1185 = vmatprep.subr.mxu0 0.0
        %1186 = vmatpush1.msra.mxu0 0.0
        %1187 = vmatprep.subr.mxu0 0.0
        %1188 = vmatpush1.msra.mxu0 0.0
        %1189 = vmatprep.subr.mxu0 0.0
        %1190 = vmatpush1.msra.mxu0 0.0
        %1191 = vmatprep.subr.mxu0 0.0
        %1192 = vmatpush1.msra.mxu0 0.0
        %1193 = vmatprep.subr.mxu0 0.0
        %1194 = vmatpush1.msra.mxu0 0.0
        %1195 = vmatprep.subr.mxu0 0.0
        %1196 = vmatpush1.msra.mxu0 0.0
        %1197 = vmatprep.subr.mxu0 0.0
        %1198 = vmatpush1.msra.mxu0 0.0
        %1199 = vmatprep.subr.mxu0 0.0
        %1200 = vmatpush1.msra.mxu0 0.0
        %1201 = vmatprep.subr.mxu0 0.0
        %1202 = vmatpush1.msra.mxu0 0.0
        %1203 = vmatprep.subr.mxu0 0.0
        %1204 = vmatpush1.msra.mxu0 0.0
        %1205 = vmatprep.subr.mxu0 0.0
        %1206 = vmatpush1.msra.mxu0 0.0
        %1207 = vmatprep.subr.mxu0 0.0
        %1208 = vmatpush1.msra.mxu0 0.0
        %1209 = vmatprep.subr.mxu0 0.0
        %1210 = vmatpush1.msra.mxu0 0.0
        %1211 = vmatprep.subr.mxu0 0.0
        %1212 = vmatpush1.msra.mxu0 0.0
        %1213 = vmatprep.mubr.f32.mxu0 0.0
        %1214 = vmatmul.mubr.f32.gmra.mrb[0].mxu0 %v1143
        %v1215 = vpop.f32.mrb[0].mxu0
        %v1216 = vadd.f32 0.0, %v1215
        %v1217 = vpop.f32.mrb[0].mxu0
        %1218 = vdwg.mxu0
        %v1220 = vsel %vm804, %v966, 0
        %v1223 = vsel %vm1145, %v971, 0
        %1225 = vmatprep.subr.mxu0 0.0
        %1226 = vmatpush1.msra.mxu0 %v969
        %1227 = vmatprep.subr.mxu0 0.0
        %1228 = vmatpush1.msra.mxu0 %v970
        %1229 = vmatprep.subr.mxu0 0.0
        %1230 = vmatpush1.msra.mxu0 %v1223
        %1231 = vmatprep.subr.mxu0 0.0
        %1232 = vmatpush1.msra.mxu0 0.0
        %1233 = vmatprep.subr.mxu0 0.0
        %1234 = vmatpush1.msra.mxu0 0.0
        %1235 = vmatprep.subr.mxu0 0.0
        %1236 = vmatpush1.msra.mxu0 0.0
        %1237 = vmatprep.subr.mxu0 0.0
        %1238 = vmatpush1.msra.mxu0 0.0
        %1239 = vmatprep.subr.mxu0 0.0
        %1240 = vmatpush1.msra.mxu0 0.0
        %1241 = vmatprep.subr.mxu0 0.0
        %1242 = vmatpush1.msra.mxu0 0.0
        %1243 = vmatprep.subr.mxu0 0.0
        %1244 = vmatpush1.msra.mxu0 0.0
        %1245 = vmatprep.subr.mxu0 0.0
        %1246 = vmatpush1.msra.mxu0 0.0
        %1247 = vmatprep.subr.mxu0 0.0
        %1248 = vmatpush1.msra.mxu0 0.0
        %1249 = vmatprep.subr.mxu0 0.0
        %1250 = vmatpush1.msra.mxu0 0.0
        %1251 = vmatprep.subr.mxu0 0.0
        %1252 = vmatpush1.msra.mxu0 0.0
        %1253 = vmatprep.subr.mxu0 0.0
        %1254 = vmatpush1.msra.mxu0 0.0
        %1255 = vmatprep.subr.mxu0 0.0
        %1256 = vmatpush1.msra.mxu0 0.0
        %1257 = vmatprep.subr.mxu0 0.0
        %1258 = vmatpush1.msra.mxu0 0.0
        %1259 = vmatprep.subr.mxu0 0.0
        %1260 = vmatpush1.msra.mxu0 0.0
        %1261 = vmatprep.subr.mxu0 0.0
        %1262 = vmatpush1.msra.mxu0 0.0
        %1263 = vmatprep.subr.mxu0 0.0
        %1264 = vmatpush1.msra.mxu0 0.0
        %1265 = vmatprep.subr.mxu0 0.0
        %1266 = vmatpush1.msra.mxu0 0.0
        %1267 = vmatprep.subr.mxu0 0.0
        %1268 = vmatpush1.msra.mxu0 0.0
        %1269 = vmatprep.subr.mxu0 0.0
        %1270 = vmatpush1.msra.mxu0 0.0
        %1271 = vmatprep.subr.mxu0 0.0
        %1272 = vmatpush1.msra.mxu0 0.0
        %1273 = vmatprep.subr.mxu0 0.0
        %1274 = vmatpush1.msra.mxu0 0.0
        %1275 = vmatprep.subr.mxu0 0.0
        %1276 = vmatpush1.msra.mxu0 0.0
        %1277 = vmatprep.subr.mxu0 0.0
        %1278 = vmatpush1.msra.mxu0 0.0
        %1279 = vmatprep.subr.mxu0 0.0
        %1280 = vmatpush1.msra.mxu0 0.0
        %1281 = vmatprep.subr.mxu0 0.0
        %1282 = vmatpush1.msra.mxu0 0.0
        %1283 = vmatprep.subr.mxu0 0.0
        %1284 = vmatpush1.msra.mxu0 0.0
        %1285 = vmatprep.subr.mxu0 0.0
        %1286 = vmatpush1.msra.mxu0 0.0
        %1287 = vmatprep.subr.mxu0 0.0
        %1288 = vmatpush1.msra.mxu0 0.0
        %1289 = vmatprep.mubr.f32.mxu0 0.0
        %1290 = vmatmul.mubr.f32.gmra.mrb[0].mxu0 %v1220
        %v1291 = vpop.f32.mrb[0].mxu0
        %v1292 = vadd.f32 %v1216, %v1291
        %v1293 = vpop.f32.mrb[0].mxu0
        %1294 = vdwg.mxu0
        %v1295 = vld [vmem:[%s8] sm:$0x1]
        %v1297 = vlaneseq
        %v1298 = vshrl.u32 %v1297, 7
        %v1299 = vsub.s32 0, %v1298
        %v1300 = vrot.slane %v1295, %v1299
        %v1302 = vadd.f32 %v1292, %v1300
        %v1303 = vadd.f32 %v675, %v1302
        %v1304 = vsel %vm676, %v1303, 0.0
        %1305 = vadd.xlane.f32.xlu0 %v1304
        %v1306 = vpop.xlane.xlu0 %1305
        %v1307 = vmul.f32 %v1306, %v680
        %v1308 = vsub.f32 %v1303, %v1307
        %v1309 = vmul.f32 %v1308, %v1308
        %v1310 = vsel %vm676, %v1309, 0.0
        %1311 = vadd.xlane.f32.xlu0 %v1310
        %v1312 = vpop.xlane.xlu0 %1311
        %v1313 = vmul.f32 %v1312, %v680
        %v1314 = vadd.f32 %v1313, 1e-06
        %v1315 = vrsqrt.pop %v1314
        %v1316 = vmul.f32 %v1308, %v1315
        %v1317 = vlaneseq
        %v1318 = vshrl.u32 %v1317, 7
        %v1319 = vsub.s32 2, %v1318
        %v1320 = vrot.slane %v673, %v1319
        %v1321 = vmul.f32 %v1316, %v1320
        %v1322 = vlaneseq
        %v1323 = vshrl.u32 %v1322, 7
        %v1324 = vsub.s32 3, %v1323
        %v1325 = vrot.slane %v673, %v1324
        %v1326 = vadd.f32 %v1321, %v1325
        %v1327 = vld [vmem:[%s9] sm:$0xff]
        %v1328 = vld [vmem:[%s9 + $0x8] sm:$0xff]
        %v1329 = vld [vmem:[%s9 + $0x10] sm:$0xff]
        %v1330 = vld [vmem:[%s9 + $0x18] sm:$0xff]
        %v1331 = vld [vmem:[%s9 + $0x20] sm:$0xff]
        %v1332 = vld [vmem:[%s10] sm:$0x1]
        %v1334 = vlaneseq
        %v1335 = vshrl.u32 %v1334, 7
        %v1336 = vsub.s32 0, %v1335
        %v1337 = vrot.slane %v1332, %v1336
        %v1340 = vsel %vm676, %v1326, 0
        %1342 = vmatprep.subr.mxu0 0.0
        %1343 = vmatpush1.msra.mxu0 %v1327
        %1344 = vmatprep.subr.mxu0 0.0
        %1345 = vmatpush1.msra.mxu0 %v1328
        %1346 = vmatprep.subr.mxu0 0.0
        %1347 = vmatpush1.msra.mxu0 %v1329
        %1348 = vmatprep.subr.mxu0 0.0
        %1349 = vmatpush1.msra.mxu0 %v1330
        %1350 = vmatprep.subr.mxu0 0.0
        %1351 = vmatpush1.msra.mxu0 %v1331
        %1352 = vmatprep.subr.mxu0 0.0
        %1353 = vmatpush1.msra.mxu0 0.0
        %1354 = vmatprep.subr.mxu0 0.0
        %1355 = vmatpush1.msra.mxu0 0.0
        %1356 = vmatprep.subr.mxu0 0.0
        %1357 = vmatpush1.msra.mxu0 0.0
        %1358 = vmatprep.subr.mxu0 0.0
        %1359 = vmatpush1.msra.mxu0 0.0
        %1360 = vmatprep.subr.mxu0 0.0
        %1361 = vmatpush1.msra.mxu0 0.0
        %1362 = vmatprep.subr.mxu0 0.0
        %1363 = vmatpush1.msra.mxu0 0.0
        %1364 = vmatprep.subr.mxu0 0.0
        %1365 = vmatpush1.msra.mxu0 0.0
        %1366 = vmatprep.subr.mxu0 0.0
        %1367 = vmatpush1.msra.mxu0 0.0
        %1368 = vmatprep.subr.mxu0 0.0
        %1369 = vmatpush1.msra.mxu0 0.0
        %1370 = vmatprep.subr.mxu0 0.0
        %1371 = vmatpush1.msra.mxu0 0.0
        %1372 = vmatprep.subr.mxu0 0.0
        %1373 = vmatpush1.msra.mxu0 0.0
        %1374 = vmatprep.subr.mxu0 0.0
        %1375 = vmatpush1.msra.mxu0 0.0
        %1376 = vmatprep.subr.mxu0 0.0
        %1377 = vmatpush1.msra.mxu0 0.0
        %1378 = vmatprep.subr.mxu0 0.0
        %1379 = vmatpush1.msra.mxu0 0.0
        %1380 = vmatprep.subr.mxu0 0.0
        %1381 = vmatpush1.msra.mxu0 0.0
        %1382 = vmatprep.subr.mxu0 0.0
        %1383 = vmatpush1.msra.mxu0 0.0
        %1384 = vmatprep.subr.mxu0 0.0
        %1385 = vmatpush1.msra.mxu0 0.0
        %1386 = vmatprep.subr.mxu0 0.0
        %1387 = vmatpush1.msra.mxu0 0.0
        %1388 = vmatprep.subr.mxu0 0.0
        %1389 = vmatpush1.msra.mxu0 0.0
        %1390 = vmatprep.subr.mxu0 0.0
        %1391 = vmatpush1.msra.mxu0 0.0
        %1392 = vmatprep.subr.mxu0 0.0
        %1393 = vmatpush1.msra.mxu0 0.0
        %1394 = vmatprep.subr.mxu0 0.0
        %1395 = vmatpush1.msra.mxu0 0.0
        %1396 = vmatprep.subr.mxu0 0.0
        %1397 = vmatpush1.msra.mxu0 0.0
        %1398 = vmatprep.subr.mxu0 0.0
        %1399 = vmatpush1.msra.mxu0 0.0
        %1400 = vmatprep.subr.mxu0 0.0
        %1401 = vmatpush1.msra.mxu0 0.0
        %1402 = vmatprep.subr.mxu0 0.0
        %1403 = vmatpush1.msra.mxu0 0.0
        %1404 = vmatprep.subr.mxu0 0.0
        %1405 = vmatpush1.msra.mxu0 0.0
        %1406 = vmatprep.mubr.f32.mxu0 0.0
        %1407 = vmatmul.mubr.f32.gmra.mrb[0].mxu0 %v1340
        %v1408 = vpop.f32.mrb[0].mxu0
        %v1409 = vadd.f32 %v1337, %v1408
        %v1410 = vpop.f32.mrb[0].mxu0
        %1411 = vdwg.mxu0
        %v1412 = vld [vmem:[%s666] sm:$0xff]
        %v1413 = vld [vmem:[%s666 + $0x8] sm:$0xf]
        %v1414 = vld [vmem:[%s11] sm:$0xff]
        %v1415 = vld [vmem:[%s11 + $0x8] sm:$0xff]
        %v1416 = vld [vmem:[%s11 + $0x10] sm:$0xff]
        %v1417 = vld [vmem:[%s11 + $0x18] sm:$0xff]
        %v1418 = vld [vmem:[%s11 + $0x20] sm:$0xff]
        %v1419 = vld [vmem:[%s12] sm:$0x1]
        %v1421 = vlaneseq
        %v1422 = vshrl.u32 %v1421, 7
        %v1423 = vsub.s32 0, %v1422
        %v1424 = vrot.slane %v1419, %v1423
        %v1427 = vsel %vm676, %v1412, 0
        %v1430 = vsel %vm676, %v1413, 0
        %1432 = vmatprep.subr.mxu0 0.0
        %1433 = vmatpush1.msra.mxu0 %v1414
        %1434 = vmatprep.subr.mxu0 0.0
        %1435 = vmatpush1.msra.mxu0 %v1415
        %1436 = vmatprep.subr.mxu0 0.0
        %1437 = vmatpush1.msra.mxu0 %v1416
        %1438 = vmatprep.subr.mxu0 0.0
        %1439 = vmatpush1.msra.mxu0 %v1417
        %1440 = vmatprep.subr.mxu0 0.0
        %1441 = vmatpush1.msra.mxu0 %v1418
        %1442 = vmatprep.subr.mxu0 0.0
        %1443 = vmatpush1.msra.mxu0 0.0
        %1444 = vmatprep.subr.mxu0 0.0
        %1445 = vmatpush1.msra.mxu0 0.0
        %1446 = vmatprep.subr.mxu0 0.0
        %1447 = vmatpush1.msra.mxu0 0.0
        %1448 = vmatprep.subr.mxu0 0.0
        %1449 = vmatpush1.msra.mxu0 0.0
        %1450 = vmatprep.subr.mxu0 0.0
        %1451 = vmatpush1.msra.mxu0 0.0
        %1452 = vmatprep.subr.mxu0 0.0
        %1453 = vmatpush1.msra.mxu0 0.0
        %1454 = vmatprep.subr.mxu0 0.0
        %1455 = vmatpush1.msra.mxu0 0.0
        %1456 = vmatprep.subr.mxu0 0.0
        %1457 = vmatpush1.msra.mxu0 0.0
        %1458 = vmatprep.subr.mxu0 0.0
        %1459 = vmatpush1.msra.mxu0 0.0
        %1460 = vmatprep.subr.mxu0 0.0
        %1461 = vmatpush1.msra.mxu0 0.0
        %1462 = vmatprep.subr.mxu0 0.0
        %1463 = vmatpush1.msra.mxu0 0.0
        %1464 = vmatprep.subr.mxu0 0.0
        %1465 = vmatpush1.msra.mxu0 0.0
        %1466 = vmatprep.subr.mxu0 0.0
        %1467 = vmatpush1.msra.mxu0 0.0
        %1468 = vmatprep.subr.mxu0 0.0
        %1469 = vmatpush1.msra.mxu0 0.0
        %1470 = vmatprep.subr.mxu0 0.0
        %1471 = vmatpush1.msra.mxu0 0.0
        %1472 = vmatprep.subr.mxu0 0.0
        %1473 = vmatpush1.msra.mxu0 0.0
        %1474 = vmatprep.subr.mxu0 0.0
        %1475 = vmatpush1.msra.mxu0 0.0
        %1476 = vmatprep.subr.mxu0 0.0
        %1477 = vmatpush1.msra.mxu0 0.0
        %1478 = vmatprep.subr.mxu0 0.0
        %1479 = vmatpush1.msra.mxu0 0.0
        %1480 = vmatprep.subr.mxu0 0.0
        %1481 = vmatpush1.msra.mxu0 0.0
        %1482 = vmatprep.subr.mxu0 0.0
        %1483 = vmatpush1.msra.mxu0 0.0
        %1484 = vmatprep.subr.mxu0 0.0
        %1485 = vmatpush1.msra.mxu0 0.0
        %1486 = vmatprep.subr.mxu0 0.0
        %1487 = vmatpush1.msra.mxu0 0.0
        %1488 = vmatprep.subr.mxu0 0.0
        %1489 = vmatpush1.msra.mxu0 0.0
        %1490 = vmatprep.subr.mxu0 0.0
        %1491 = vmatpush1.msra.mxu0 0.0
        %1492 = vmatprep.subr.mxu0 0.0
        %1493 = vmatpush1.msra.mxu0 0.0
        %1494 = vmatprep.subr.mxu0 0.0
        %1495 = vmatpush1.msra.mxu0 0.0
        %1496 = vmatprep.mubr.f32.mxu0 0.0
        %1497 = vmatmul.mubr.f32.gmra.mrb[0].mxu0 %v1427
        %v1498 = vpop.f32.mrb[0].mxu0
        %v1499 = vadd.f32 %v1424, %v1498
        %v1500 = vpop.f32.mrb[0].mxu0
        %1501 = vmatprep.mubr.f32.mxu0 0.0
        %1502 = vmatmul.mubr.f32.gmra.mrb[0].mxu0 %v1430
        %v1503 = vpop.f32.mrb[0].mxu0
        %v1504 = vadd.f32 %v1424, %v1503
        %v1505 = vpop.f32.mrb[0].mxu0
        %1506 = vdwg.mxu0
        %v1507 = vld [vmem:[%s669] sm:$0x1]
        %vm1508 = vcmp.ne.s32.totalorder %v1507, 0
        %v1509 = vmul.f32 %v1409, 0.2236068
        %v1511 = vsel %vm804, %v1509, 0
        %v1514 = vsel %vm804, %v1499, 0
        %v1517 = vsel %vm804, %v1504, 0
        %1519 = vmatprep.subr.mxu0 0.0
        %1520 = vmatpush1.xpose.msra.mxu0 %v1514
        %1521 = vmatprep.subr.mxu0 0.0
        %1522 = vmatpush1.xpose.msra.mxu0 %v1517
        %1523 = vmatprep.subr.mxu0 0.0
        %1524 = vmatpush1.xpose.msra.mxu0 0.0
        %1525 = vmatprep.subr.mxu0 0.0
        %1526 = vmatpush1.xpose.msra.mxu0 0.0
        %1527 = vmatprep.subr.mxu0 0.0
        %1528 = vmatpush1.xpose.msra.mxu0 0.0
        %1529 = vmatprep.subr.mxu0 0.0
        %1530 = vmatpush1.xpose.msra.mxu0 0.0
        %1531 = vmatprep.subr.mxu0 0.0
        %1532 = vmatpush1.xpose.msra.mxu0 0.0
        %1533 = vmatprep.subr.mxu0 0.0
        %1534 = vmatpush1.xpose.msra.mxu0 0.0
        %1535 = vmatprep.subr.mxu0 0.0
        %1536 = vmatpush1.xpose.msra.mxu0 0.0
        %1537 = vmatprep.subr.mxu0 0.0
        %1538 = vmatpush1.xpose.msra.mxu0 0.0
        %1539 = vmatprep.subr.mxu0 0.0
        %1540 = vmatpush1.xpose.msra.mxu0 0.0
        %1541 = vmatprep.subr.mxu0 0.0
        %1542 = vmatpush1.xpose.msra.mxu0 0.0
        %1543 = vmatprep.subr.mxu0 0.0
        %1544 = vmatpush1.xpose.msra.mxu0 0.0
        %1545 = vmatprep.subr.mxu0 0.0
        %1546 = vmatpush1.xpose.msra.mxu0 0.0
        %1547 = vmatprep.subr.mxu0 0.0
        %1548 = vmatpush1.xpose.msra.mxu0 0.0
        %1549 = vmatprep.subr.mxu0 0.0
        %1550 = vmatpush1.xpose.msra.mxu0 0.0
        %1551 = vmatprep.subr.mxu0 0.0
        %1552 = vmatpush1.xpose.msra.mxu0 0.0
        %1553 = vmatprep.subr.mxu0 0.0
        %1554 = vmatpush1.xpose.msra.mxu0 0.0
        %1555 = vmatprep.subr.mxu0 0.0
        %1556 = vmatpush1.xpose.msra.mxu0 0.0
        %1557 = vmatprep.subr.mxu0 0.0
        %1558 = vmatpush1.xpose.msra.mxu0 0.0
        %1559 = vmatprep.subr.mxu0 0.0
        %1560 = vmatpush1.xpose.msra.mxu0 0.0
        %1561 = vmatprep.subr.mxu0 0.0
        %1562 = vmatpush1.xpose.msra.mxu0 0.0
        %1563 = vmatprep.subr.mxu0 0.0
        %1564 = vmatpush1.xpose.msra.mxu0 0.0
        %1565 = vmatprep.subr.mxu0 0.0
        %1566 = vmatpush1.xpose.msra.mxu0 0.0
        %1567 = vmatprep.subr.mxu0 0.0
        %1568 = vmatpush1.xpose.msra.mxu0 0.0
        %1569 = vmatprep.subr.mxu0 0.0
        %1570 = vmatpush1.xpose.msra.mxu0 0.0
        %1571 = vmatprep.subr.mxu0 0.0
        %1572 = vmatpush1.xpose.msra.mxu0 0.0
        %1573 = vmatprep.subr.mxu0 0.0
        %1574 = vmatpush1.xpose.msra.mxu0 0.0
        %1575 = vmatprep.subr.mxu0 0.0
        %1576 = vmatpush1.xpose.msra.mxu0 0.0
        %1577 = vmatprep.subr.mxu0 0.0
        %1578 = vmatpush1.xpose.msra.mxu0 0.0
        %1579 = vmatprep.subr.mxu0 0.0
        %1580 = vmatpush1.xpose.msra.mxu0 0.0
        %1581 = vmatprep.subr.mxu0 0.0
        %1582 = vmatpush1.xpose.msra.mxu0 0.0
        %1583 = vmatprep.mubr.f32.mxu0 0.0
        %1584 = vmatmul.mubr.f32.gmra.mrb[0].mxu0 %v1511
        %v1585 = vpop.f32.mrb[0].mxu0
        %v1586 = vadd.f32 0.0, %v1585
        %v1587 = vpop.f32.mrb[0].mxu0
        %1588 = vdwg.mxu0
        %v1589 = vsel %vm1508, 1, 0
        %v1590 = vlaneseq
        %v1591 = vshrl.u32 %v1590, 7
        %v1592 = vsub.s32 0, %v1591
        %v1593 = vrot.slane %v1589, %v1592
        %vm1594 = vcmp.eq.s32.totalorder %v1593, 1
        %v1595 = vsel %vm1594, %v1586, -1e+09
        %vm1596 = vcmask 97280
        %v1597 = vsel %vm1596, %v1595, -inf
        %1598 = vmax.xlane.f32.xlu0 %v1597
        %v1599 = vpop.xlane.xlu0 %1598
        %v1600 = vsub.f32 %v1595, %v1599
        %v1601 = vmul.f32 %v1600, 1.442695
        %v1602 = vpow.pop %v1601
        %v1603 = vsel %vm1596, %v1602, 0.0
        %1604 = vadd.xlane.f32.xlu0 %v1603
        %v1605 = vpop.xlane.xlu0 %1604
        %v1606 = vrcp.pop %v1605
        %v1607 = vmul.f32 %v1602, %v1606
        %1608 = vrot.lane.b32.xlu0 %v1499, 88
        %v1609 = vpop.permute.xlu0 %1608
        %1610 = vrot.lane.b32.xlu0 %v1504, 88
        %v1611 = vpop.permute.xlu0 %1610
        %v1614 = vsel %vm1596, %v1607, 0
        %v1616 = vsel %vm1145, %v1611, 0
        %1618 = vmatprep.subr.mxu0 0.0
        %1619 = vmatpush1.msra.mxu0 %v1609
        %1620 = vmatprep.subr.mxu0 0.0
        %1621 = vmatpush1.msra.mxu0 %v1616
        %1622 = vmatprep.subr.mxu0 0.0
        %1623 = vmatpush1.msra.mxu0 0.0
        %1624 = vmatprep.subr.mxu0 0.0
        %1625 = vmatpush1.msra.mxu0 0.0
        %1626 = vmatprep.subr.mxu0 0.0
        %1627 = vmatpush1.msra.mxu0 0.0
        %1628 = vmatprep.subr.mxu0 0.0
        %1629 = vmatpush1.msra.mxu0 0.0
        %1630 = vmatprep.subr.mxu0 0.0
        %1631 = vmatpush1.msra.mxu0 0.0
        %1632 = vmatprep.subr.mxu0 0.0
        %1633 = vmatpush1.msra.mxu0 0.0
        %1634 = vmatprep.subr.mxu0 0.0
        %1635 = vmatpush1.msra.mxu0 0.0
        %1636 = vmatprep.subr.mxu0 0.0
        %1637 = vmatpush1.msra.mxu0 0.0
        %1638 = vmatprep.subr.mxu0 0.0
        %1639 = vmatpush1.msra.mxu0 0.0
        %1640 = vmatprep.subr.mxu0 0.0
        %1641 = vmatpush1.msra.mxu0 0.0
        %1642 = vmatprep.subr.mxu0 0.0
        %1643 = vmatpush1.msra.mxu0 0.0
        %1644 = vmatprep.subr.mxu0 0.0
        %1645 = vmatpush1.msra.mxu0 0.0
        %1646 = vmatprep.subr.mxu0 0.0
        %1647 = vmatpush1.msra.mxu0 0.0
        %1648 = vmatprep.subr.mxu0 0.0
        %1649 = vmatpush1.msra.mxu0 0.0
        %1650 = vmatprep.subr.mxu0 0.0
        %1651 = vmatpush1.msra.mxu0 0.0
        %1652 = vmatprep.subr.mxu0 0.0
        %1653 = vmatpush1.msra.mxu0 0.0
        %1654 = vmatprep.subr.mxu0 0.0
        %1655 = vmatpush1.msra.mxu0 0.0
        %1656 = vmatprep.subr.mxu0 0.0
        %1657 = vmatpush1.msra.mxu0 0.0
        %1658 = vmatprep.subr.mxu0 0.0
        %1659 = vmatpush1.msra.mxu0 0.0
        %1660 = vmatprep.subr.mxu0 0.0
        %1661 = vmatpush1.msra.mxu0 0.0
        %1662 = vmatprep.subr.mxu0 0.0
        %1663 = vmatpush1.msra.mxu0 0.0
        %1664 = vmatprep.subr.mxu0 0.0
        %1665 = vmatpush1.msra.mxu0 0.0
        %1666 = vmatprep.subr.mxu0 0.0
        %1667 = vmatpush1.msra.mxu0 0.0
        %1668 = vmatprep.subr.mxu0 0.0
        %1669 = vmatpush1.msra.mxu0 0.0
        %1670 = vmatprep.subr.mxu0 0.0
        %1671 = vmatpush1.msra.mxu0 0.0
        %1672 = vmatprep.subr.mxu0 0.0
        %1673 = vmatpush1.msra.mxu0 0.0
        %1674 = vmatprep.subr.mxu0 0.0
        %1675 = vmatpush1.msra.mxu0 0.0
        %1676 = vmatprep.subr.mxu0 0.0
        %1677 = vmatpush1.msra.mxu0 0.0
        %1678 = vmatprep.subr.mxu0 0.0
        %1679 = vmatpush1.msra.mxu0 0.0
        %1680 = vmatprep.subr.mxu0 0.0
        %1681 = vmatpush1.msra.mxu0 0.0
        %1682 = vmatprep.mubr.f32.mxu0 0.0
        %1683 = vmatmul.mubr.f32.gmra.mrb[0].mxu0 %v1614
        %v1684 = vpop.f32.mrb[0].mxu0
        %v1685 = vadd.f32 0.0, %v1684
        %v1686 = vpop.f32.mrb[0].mxu0
        %1687 = vdwg.mxu0
        %v1688 = vld [vmem:[%s13] sm:$0xff]
        %v1689 = vld [vmem:[%s13 + $0x8] sm:$0xff]
        %v1690 = vld [vmem:[%s13 + $0x10] sm:$0xf]
        %1691 = vrot.lane.b32.xlu0 %v1509, 108
        %v1692 = vpop.permute.xlu0 %1691
        %1693 = vrot.lane.b32.xlu0 %v1499, 108
        %v1694 = vpop.permute.xlu0 %1693
        %1695 = vrot.lane.b32.xlu0 %v1504, 108
        %v1696 = vpop.permute.xlu0 %1695
        %v1697 = vsel %vm804, %v1692, 0
        %v1699 = vsel %vm804, %v1694, 0
        %v1701 = vsel %vm804, %v1696, 0
        %1703 = vmatprep.subr.mxu0 0.0
        %1704 = vmatpush1.xpose.msra.mxu0 %v1699
        %1705 = vmatprep.subr.mxu0 0.0
        %1706 = vmatpush1.xpose.msra.mxu0 %v1701
        %1707 = vmatprep.subr.mxu0 0.0
        %1708 = vmatpush1.xpose.msra.mxu0 0.0
        %1709 = vmatprep.subr.mxu0 0.0
        %1710 = vmatpush1.xpose.msra.mxu0 0.0
        %1711 = vmatprep.subr.mxu0 0.0
        %1712 = vmatpush1.xpose.msra.mxu0 0.0
        %1713 = vmatprep.subr.mxu0 0.0
        %1714 = vmatpush1.xpose.msra.mxu0 0.0
        %1715 = vmatprep.subr.mxu0 0.0
        %1716 = vmatpush1.xpose.msra.mxu0 0.0
        %1717 = vmatprep.subr.mxu0 0.0
        %1718 = vmatpush1.xpose.msra.mxu0 0.0
        %1719 = vmatprep.subr.mxu0 0.0
        %1720 = vmatpush1.xpose.msra.mxu0 0.0
        %1721 = vmatprep.subr.mxu0 0.0
        %1722 = vmatpush1.xpose.msra.mxu0 0.0
        %1723 = vmatprep.subr.mxu0 0.0
        %1724 = vmatpush1.xpose.msra.mxu0 0.0
        %1725 = vmatprep.subr.mxu0 0.0
        %1726 = vmatpush1.xpose.msra.mxu0 0.0
        %1727 = vmatprep.subr.mxu0 0.0
        %1728 = vmatpush1.xpose.msra.mxu0 0.0
        %1729 = vmatprep.subr.mxu0 0.0
        %1730 = vmatpush1.xpose.msra.mxu0 0.0
        %1731 = vmatprep.subr.mxu0 0.0
        %1732 = vmatpush1.xpose.msra.mxu0 0.0
        %1733 = vmatprep.subr.mxu0 0.0
        %1734 = vmatpush1.xpose.msra.mxu0 0.0
        %1735 = vmatprep.subr.mxu0 0.0
        %1736 = vmatpush1.xpose.msra.mxu0 0.0
        %1737 = vmatprep.subr.mxu0 0.0
        %1738 = vmatpush1.xpose.msra.mxu0 0.0
        %1739 = vmatprep.subr.mxu0 0.0
        %1740 = vmatpush1.xpose.msra.mxu0 0.0
        %1741 = vmatprep.subr.mxu0 0.0
        %1742 = vmatpush1.xpose.msra.mxu0 0.0
        %1743 = vmatprep.subr.mxu0 0.0
        %1744 = vmatpush1.xpose.msra.mxu0 0.0
        %1745 = vmatprep.subr.mxu0 0.0
        %1746 = vmatpush1.xpose.msra.mxu0 0.0
        %1747 = vmatprep.subr.mxu0 0.0
        %1748 = vmatpush1.xpose.msra.mxu0 0.0
        %1749 = vmatprep.subr.mxu0 0.0
        %1750 = vmatpush1.xpose.msra.mxu0 0.0
        %1751 = vmatprep.subr.mxu0 0.0
        %1752 = vmatpush1.xpose.msra.mxu0 0.0
        %1753 = vmatprep.subr.mxu0 0.0
        %1754 = vmatpush1.xpose.msra.mxu0 0.0
        %1755 = vmatprep.subr.mxu0 0.0
        %1756 = vmatpush1.xpose.msra.mxu0 0.0
        %1757 = vmatprep.subr.mxu0 0.0
        %1758 = vmatpush1.xpose.msra.mxu0 0.0
        %1759 = vmatprep.subr.mxu0 0.0
        %1760 = vmatpush1.xpose.msra.mxu0 0.0
        %1761 = vmatprep.subr.mxu0 0.0
        %1762 = vmatpush1.xpose.msra.mxu0 0.0
        %1763 = vmatprep.subr.mxu0 0.0
        %1764 = vmatpush1.xpose.msra.mxu0 0.0
        %1765 = vmatprep.subr.mxu0 0.0
        %1766 = vmatpush1.xpose.msra.mxu0 0.0
        %1767 = vmatprep.mubr.f32.mxu0 0.0
        %1768 = vmatmul.mubr.f32.gmra.mrb[0].mxu0 %v1697
        %v1769 = vpop.f32.mrb[0].mxu0
        %v1770 = vadd.f32 0.0, %v1769
        %v1771 = vpop.f32.mrb[0].mxu0
        %1772 = vdwg.mxu0
        %v1773 = vsel %vm1594, %v1770, -1e+09
        %v1774 = vsel %vm1596, %v1773, -inf
        %1775 = vmax.xlane.f32.xlu0 %v1774
        %v1776 = vpop.xlane.xlu0 %1775
        %v1777 = vsub.f32 %v1773, %v1776
        %v1778 = vmul.f32 %v1777, 1.442695
        %v1779 = vpow.pop %v1778
        %v1780 = vsel %vm1596, %v1779, 0.0
        %1781 = vadd.xlane.f32.xlu0 %v1780
        %v1782 = vpop.xlane.xlu0 %1781
        %v1783 = vrcp.pop %v1782
        %v1784 = vmul.f32 %v1779, %v1783
        %1785 = vrot.lane.b32.xlu0 %v1499, 68
        %v1786 = vpop.permute.xlu0 %1785
        %1787 = vrot.lane.b32.xlu0 %v1504, 68
        %v1788 = vpop.permute.xlu0 %1787
        %v1791 = vsel %vm1596, %v1784, 0
        %v1793 = vsel %vm1145, %v1788, 0
        %1795 = vmatprep.subr.mxu0 0.0
        %1796 = vmatpush1.msra.mxu0 %v1786
        %1797 = vmatprep.subr.mxu0 0.0
        %1798 = vmatpush1.msra.mxu0 %v1793
        %1799 = vmatprep.subr.mxu0 0.0
        %1800 = vmatpush1.msra.mxu0 0.0
        %1801 = vmatprep.subr.mxu0 0.0
        %1802 = vmatpush1.msra.mxu0 0.0
        %1803 = vmatprep.subr.mxu0 0.0
        %1804 = vmatpush1.msra.mxu0 0.0
        %1805 = vmatprep.subr.mxu0 0.0
        %1806 = vmatpush1.msra.mxu0 0.0
        %1807 = vmatprep.subr.mxu0 0.0
        %1808 = vmatpush1.msra.mxu0 0.0
        %1809 = vmatprep.subr.mxu0 0.0
        %1810 = vmatpush1.msra.mxu0 0.0
        %1811 = vmatprep.subr.mxu0 0.0
        %1812 = vmatpush1.msra.mxu0 0.0
        %1813 = vmatprep.subr.mxu0 0.0
        %1814 = vmatpush1.msra.mxu0 0.0
        %1815 = vmatprep.subr.mxu0 0.0
        %1816 = vmatpush1.msra.mxu0 0.0
        %1817 = vmatprep.subr.mxu0 0.0
        %1818 = vmatpush1.msra.mxu0 0.0
        %1819 = vmatprep.subr.mxu0 0.0
        %1820 = vmatpush1.msra.mxu0 0.0
        %1821 = vmatprep.subr.mxu0 0.0
        %1822 = vmatpush1.msra.mxu0 0.0
        %1823 = vmatprep.subr.mxu0 0.0
        %1824 = vmatpush1.msra.mxu0 0.0
        %1825 = vmatprep.subr.mxu0 0.0
        %1826 = vmatpush1.msra.mxu0 0.0
        %1827 = vmatprep.subr.mxu0 0.0
        %1828 = vmatpush1.msra.mxu0 0.0
        %1829 = vmatprep.subr.mxu0 0.0
        %1830 = vmatpush1.msra.mxu0 0.0
        %1831 = vmatprep.subr.mxu0 0.0
        %1832 = vmatpush1.msra.mxu0 0.0
        %1833 = vmatprep.subr.mxu0 0.0
        %1834 = vmatpush1.msra.mxu0 0.0
        %1835 = vmatprep.subr.mxu0 0.0
        %1836 = vmatpush1.msra.mxu0 0.0
        %1837 = vmatprep.subr.mxu0 0.0
        %1838 = vmatpush1.msra.mxu0 0.0
        %1839 = vmatprep.subr.mxu0 0.0
        %1840 = vmatpush1.msra.mxu0 0.0
        %1841 = vmatprep.subr.mxu0 0.0
        %1842 = vmatpush1.msra.mxu0 0.0
        %1843 = vmatprep.subr.mxu0 0.0
        %1844 = vmatpush1.msra.mxu0 0.0
        %1845 = vmatprep.subr.mxu0 0.0
        %1846 = vmatpush1.msra.mxu0 0.0
        %1847 = vmatprep.subr.mxu0 0.0
        %1848 = vmatpush1.msra.mxu0 0.0
        %1849 = vmatprep.subr.mxu0 0.0
        %1850 = vmatpush1.msra.mxu0 0.0
        %1851 = vmatprep.subr.mxu0 0.0
        %1852 = vmatpush1.msra.mxu0 0.0
        %1853 = vmatprep.subr.mxu0 0.0
        %1854 = vmatpush1.msra.mxu0 0.0
        %1855 = vmatprep.subr.mxu0 0.0
        %1856 = vmatpush1.msra.mxu0 0.0
        %1857 = vmatprep.subr.mxu0 0.0
        %1858 = vmatpush1.msra.mxu0 0.0
        %1859 = vmatprep.mubr.f32.mxu0 0.0
        %1860 = vmatmul.mubr.f32.gmra.mrb[0].mxu0 %v1791
        %v1861 = vpop.f32.mrb[0].mxu0
        %v1862 = vadd.f32 0.0, %v1861
        %v1863 = vpop.f32.mrb[0].mxu0
        %1864 = vdwg.mxu0
        %s1865 = scalar_lea.vmem %s13, 24
        %v1866 = vld [vmem:[%s1865] sm:$0xff]
        %v1867 = vld [vmem:[%s1865 + $0x8] sm:$0xff]
        %v1868 = vld [vmem:[%s1865 + $0x10] sm:$0xf]
        %v1870 = vsel %vm804, %v1862, 0
        %v1873 = vsel %vm1145, %v1868, 0
        %1875 = vmatprep.subr.mxu0 0.0
        %1876 = vmatpush1.msra.mxu0 %v1866
        %1877 = vmatprep.subr.mxu0 0.0
        %1878 = vmatpush1.msra.mxu0 %v1867
        %1879 = vmatprep.subr.mxu0 0.0
        %1880 = vmatpush1.msra.mxu0 %v1873
        %1881 = vmatprep.subr.mxu0 0.0
        %1882 = vmatpush1.msra.mxu0 0.0
        %1883 = vmatprep.subr.mxu0 0.0
        %1884 = vmatpush1.msra.mxu0 0.0
        %1885 = vmatprep.subr.mxu0 0.0
        %1886 = vmatpush1.msra.mxu0 0.0
        %1887 = vmatprep.subr.mxu0 0.0
        %1888 = vmatpush1.msra.mxu0 0.0
        %1889 = vmatprep.subr.mxu0 0.0
        %1890 = vmatpush1.msra.mxu0 0.0
        %1891 = vmatprep.subr.mxu0 0.0
        %1892 = vmatpush1.msra.mxu0 0.0
        %1893 = vmatprep.subr.mxu0 0.0
        %1894 = vmatpush1.msra.mxu0 0.0
        %1895 = vmatprep.subr.mxu0 0.0
        %1896 = vmatpush1.msra.mxu0 0.0
        %1897 = vmatprep.subr.mxu0 0.0
        %1898 = vmatpush1.msra.mxu0 0.0
        %1899 = vmatprep.subr.mxu0 0.0
        %1900 = vmatpush1.msra.mxu0 0.0
        %1901 = vmatprep.subr.mxu0 0.0
        %1902 = vmatpush1.msra.mxu0 0.0
        %1903 = vmatprep.subr.mxu0 0.0
        %1904 = vmatpush1.msra.mxu0 0.0
        %1905 = vmatprep.subr.mxu0 0.0
        %1906 = vmatpush1.msra.mxu0 0.0
        %1907 = vmatprep.subr.mxu0 0.0
        %1908 = vmatpush1.msra.mxu0 0.0
        %1909 = vmatprep.subr.mxu0 0.0
        %1910 = vmatpush1.msra.mxu0 0.0
        %1911 = vmatprep.subr.mxu0 0.0
        %1912 = vmatpush1.msra.mxu0 0.0
        %1913 = vmatprep.subr.mxu0 0.0
        %1914 = vmatpush1.msra.mxu0 0.0
        %1915 = vmatprep.subr.mxu0 0.0
        %1916 = vmatpush1.msra.mxu0 0.0
        %1917 = vmatprep.subr.mxu0 0.0
        %1918 = vmatpush1.msra.mxu0 0.0
        %1919 = vmatprep.subr.mxu0 0.0
        %1920 = vmatpush1.msra.mxu0 0.0
        %1921 = vmatprep.subr.mxu0 0.0
        %1922 = vmatpush1.msra.mxu0 0.0
        %1923 = vmatprep.subr.mxu0 0.0
        %1924 = vmatpush1.msra.mxu0 0.0
        %1925 = vmatprep.subr.mxu0 0.0
        %1926 = vmatpush1.msra.mxu0 0.0
        %1927 = vmatprep.subr.mxu0 0.0
        %1928 = vmatpush1.msra.mxu0 0.0
        %1929 = vmatprep.subr.mxu0 0.0
        %1930 = vmatpush1.msra.mxu0 0.0
        %1931 = vmatprep.subr.mxu0 0.0
        %1932 = vmatpush1.msra.mxu0 0.0
        %1933 = vmatprep.subr.mxu0 0.0
        %1934 = vmatpush1.msra.mxu0 0.0
        %1935 = vmatprep.subr.mxu0 0.0
        %1936 = vmatpush1.msra.mxu0 0.0
        %1937 = vmatprep.subr.mxu0 0.0
        %1938 = vmatpush1.msra.mxu0 0.0
        %1939 = vmatprep.mubr.f32.mxu0 0.0
        %1940 = vmatmul.mubr.f32.gmra.mrb[0].mxu0 %v1870
        %v1941 = vpop.f32.mrb[0].mxu0
        %v1942 = vadd.f32 0.0, %v1941
        %v1943 = vpop.f32.mrb[0].mxu0
        %1944 = vdwg.mxu0
        %v1946 = vsel %vm804, %v1685, 0
        %v1949 = vsel %vm1145, %v1690, 0
        %1951 = vmatprep.subr.mxu0 0.0
        %1952 = vmatpush1.msra.mxu0 %v1688
        %1953 = vmatprep.subr.mxu0 0.0
        %1954 = vmatpush1.msra.mxu0 %v1689
        %1955 = vmatprep.subr.mxu0 0.0
        %1956 = vmatpush1.msra.mxu0 %v1949
        %1957 = vmatprep.subr.mxu0 0.0
        %1958 = vmatpush1.msra.mxu0 0.0
        %1959 = vmatprep.subr.mxu0 0.0
        %1960 = vmatpush1.msra.mxu0 0.0
        %1961 = vmatprep.subr.mxu0 0.0
        %1962 = vmatpush1.msra.mxu0 0.0
        %1963 = vmatprep.subr.mxu0 0.0
        %1964 = vmatpush1.msra.mxu0 0.0
        %1965 = vmatprep.subr.mxu0 0.0
        %1966 = vmatpush1.msra.mxu0 0.0
        %1967 = vmatprep.subr.mxu0 0.0
        %1968 = vmatpush1.msra.mxu0 0.0
        %1969 = vmatprep.subr.mxu0 0.0
        %1970 = vmatpush1.msra.mxu0 0.0
        %1971 = vmatprep.subr.mxu0 0.0
        %1972 = vmatpush1.msra.mxu0 0.0
        %1973 = vmatprep.subr.mxu0 0.0
        %1974 = vmatpush1.msra.mxu0 0.0
        %1975 = vmatprep.subr.mxu0 0.0
        %1976 = vmatpush1.msra.mxu0 0.0
        %1977 = vmatprep.subr.mxu0 0.0
        %1978 = vmatpush1.msra.mxu0 0.0
        %1979 = vmatprep.subr.mxu0 0.0
        %1980 = vmatpush1.msra.mxu0 0.0
        %1981 = vmatprep.subr.mxu0 0.0
        %1982 = vmatpush1.msra.mxu0 0.0
        %1983 = vmatprep.subr.mxu0 0.0
        %1984 = vmatpush1.msra.mxu0 0.0
        %1985 = vmatprep.subr.mxu0 0.0
        %1986 = vmatpush1.msra.mxu0 0.0
        %1987 = vmatprep.subr.mxu0 0.0
        %1988 = vmatpush1.msra.mxu0 0.0
        %1989 = vmatprep.subr.mxu0 0.0
        %1990 = vmatpush1.msra.mxu0 0.0
        %1991 = vmatprep.subr.mxu0 0.0
        %1992 = vmatpush1.msra.mxu0 0.0
        %1993 = vmatprep.subr.mxu0 0.0
        %1994 = vmatpush1.msra.mxu0 0.0
        %1995 = vmatprep.subr.mxu0 0.0
        %1996 = vmatpush1.msra.mxu0 0.0
        %1997 = vmatprep.subr.mxu0 0.0
        %1998 = vmatpush1.msra.mxu0 0.0
        %1999 = vmatprep.subr.mxu0 0.0
        %2000 = vmatpush1.msra.mxu0 0.0
        %2001 = vmatprep.subr.mxu0 0.0
        %2002 = vmatpush1.msra.mxu0 0.0
        %2003 = vmatprep.subr.mxu0 0.0
        %2004 = vmatpush1.msra.mxu0 0.0
        %2005 = vmatprep.subr.mxu0 0.0
        %2006 = vmatpush1.msra.mxu0 0.0
        %2007 = vmatprep.subr.mxu0 0.0
        %2008 = vmatpush1.msra.mxu0 0.0
        %2009 = vmatprep.subr.mxu0 0.0
        %2010 = vmatpush1.msra.mxu0 0.0
        %2011 = vmatprep.subr.mxu0 0.0
        %2012 = vmatpush1.msra.mxu0 0.0
        %2013 = vmatprep.subr.mxu0 0.0
        %2014 = vmatpush1.msra.mxu0 0.0
        %2015 = vmatprep.mubr.f32.mxu0 0.0
        %2016 = vmatmul.mubr.f32.gmra.mrb[0].mxu0 %v1946
        %v2017 = vpop.f32.mrb[0].mxu0
        %v2018 = vadd.f32 %v1942, %v2017
        %v2019 = vpop.f32.mrb[0].mxu0
        %2020 = vdwg.mxu0
        %v2021 = vld [vmem:[%s14] sm:$0x1]
        %v2023 = vlaneseq
        %v2024 = vshrl.u32 %v2023, 7
        %v2025 = vsub.s32 0, %v2024
        %v2026 = vrot.slane %v2021, %v2025
        %v2028 = vadd.f32 %v2018, %v2026
        %v2029 = vadd.f32 %v1303, %v2028
        %v2030 = vsel %vm676, %v2029, 0.0
        %2031 = vadd.xlane.f32.xlu0 %v2030
        %v2032 = vpop.xlane.xlu0 %2031
        %v2033 = vmul.f32 %v2032, %v680
        %v2034 = vsub.f32 %v2029, %v2033
        %v2035 = vmul.f32 %v2034, %v2034
        %v2036 = vsel %vm676, %v2035, 0.0
        %2037 = vadd.xlane.f32.xlu0 %v2036
        %v2038 = vpop.xlane.xlu0 %2037
        %v2039 = vmul.f32 %v2038, %v680
        %v2040 = vadd.f32 %v2039, 1e-06
        %v2041 = vrsqrt.pop %v2040
        %v2042 = vmul.f32 %v2034, %v2041
        %v2043 = vlaneseq
        %v2044 = vshrl.u32 %v2043, 7
        %v2045 = vsub.s32 4, %v2044
        %v2046 = vrot.slane %v673, %v2045
        %v2047 = vmul.f32 %v2042, %v2046
        %v2048 = vlaneseq
        %v2049 = vshrl.u32 %v2048, 7
        %v2050 = vsub.s32 5, %v2049
        %v2051 = vrot.slane %v673, %v2050
        %v2052 = vadd.f32 %v2047, %v2051
        %v2053 = vld [vmem:[%s15] sm:$0xff]
        %v2054 = vld [vmem:[%s15 + $0x8] sm:$0xff]
        %v2055 = vld [vmem:[%s15 + $0x10] sm:$0xff]
        %v2056 = vld [vmem:[%s15 + $0x18] sm:$0xff]
        %v2057 = vld [vmem:[%s15 + $0x20] sm:$0xff]
        %v2058 = vld [vmem:[%s16] sm:$0x1]
        %v2060 = vlaneseq
        %v2061 = vshrl.u32 %v2060, 7
        %v2062 = vsub.s32 0, %v2061
        %v2063 = vrot.slane %v2058, %v2062
        %v2066 = vsel %vm676, %v2052, 0
        %2068 = vmatprep.subr.mxu0 0.0
        %2069 = vmatpush1.msra.mxu0 %v2053
        %2070 = vmatprep.subr.mxu0 0.0
        %2071 = vmatpush1.msra.mxu0 %v2054
        %2072 = vmatprep.subr.mxu0 0.0
        %2073 = vmatpush1.msra.mxu0 %v2055
        %2074 = vmatprep.subr.mxu0 0.0
        %2075 = vmatpush1.msra.mxu0 %v2056
        %2076 = vmatprep.subr.mxu0 0.0
        %2077 = vmatpush1.msra.mxu0 %v2057
        %2078 = vmatprep.subr.mxu0 0.0
        %2079 = vmatpush1.msra.mxu0 0.0
        %2080 = vmatprep.subr.mxu0 0.0
        %2081 = vmatpush1.msra.mxu0 0.0
        %2082 = vmatprep.subr.mxu0 0.0
        %2083 = vmatpush1.msra.mxu0 0.0
        %2084 = vmatprep.subr.mxu0 0.0
        %2085 = vmatpush1.msra.mxu0 0.0
        %2086 = vmatprep.subr.mxu0 0.0
        %2087 = vmatpush1.msra.mxu0 0.0
        %2088 = vmatprep.subr.mxu0 0.0
        %2089 = vmatpush1.msra.mxu0 0.0
        %2090 = vmatprep.subr.mxu0 0.0
        %2091 = vmatpush1.msra.mxu0 0.0
        %2092 = vmatprep.subr.mxu0 0.0
        %2093 = vmatpush1.msra.mxu0 0.0
        %2094 = vmatprep.subr.mxu0 0.0
        %2095 = vmatpush1.msra.mxu0 0.0
        %2096 = vmatprep.subr.mxu0 0.0
        %2097 = vmatpush1.msra.mxu0 0.0
        %2098 = vmatprep.subr.mxu0 0.0
        %2099 = vmatpush1.msra.mxu0 0.0
        %2100 = vmatprep.subr.mxu0 0.0
        %2101 = vmatpush1.msra.mxu0 0.0
        %2102 = vmatprep.subr.mxu0 0.0
        %2103 = vmatpush1.msra.mxu0 0.0
        %2104 = vmatprep.subr.mxu0 0.0
        %2105 = vmatpush1.msra.mxu0 0.0
        %2106 = vmatprep.subr.mxu0 0.0
        %2107 = vmatpush1.msra.mxu0 0.0
        %2108 = vmatprep.subr.mxu0 0.0
        %2109 = vmatpush1.msra.mxu0 0.0
        %2110 = vmatprep.subr.mxu0 0.0
        %2111 = vmatpush1.msra.mxu0 0.0
        %2112 = vmatprep.subr.mxu0 0.0
        %2113 = vmatpush1.msra.mxu0 0.0
        %2114 = vmatprep.subr.mxu0 0.0
        %2115 = vmatpush1.msra.mxu0 0.0
        %2116 = vmatprep.subr.mxu0 0.0
        %2117 = vmatpush1.msra.mxu0 0.0
        %2118 = vmatprep.subr.mxu0 0.0
        %2119 = vmatpush1.msra.mxu0 0.0
        %2120 = vmatprep.subr.mxu0 0.0
        %2121 = vmatpush1.msra.mxu0 0.0
        %2122 = vmatprep.subr.mxu0 0.0
        %2123 = vmatpush1.msra.mxu0 0.0
        %2124 = vmatprep.subr.mxu0 0.0
        %2125 = vmatpush1.msra.mxu0 0.0
        %2126 = vmatprep.subr.mxu0 0.0
        %2127 = vmatpush1.msra.mxu0 0.0
        %2128 = vmatprep.subr.mxu0 0.0
        %2129 = vmatpush1.msra.mxu0 0.0
        %2130 = vmatprep.subr.mxu0 0.0
        %2131 = vmatpush1.msra.mxu0 0.0
        %2132 = vmatprep.mubr.f32.mxu0 0.0
        %2133 = vmatmul.mubr.f32.gmra.mrb[0].mxu0 %v2066
        %v2134 = vpop.f32.mrb[0].mxu0
        %v2135 = vadd.f32 %v2063, %v2134
        %v2136 = vpop.f32.mrb[0].mxu0
        %2137 = vdwg.mxu0
        %v2138 = vmax.f32 %v2135, 0.0
        %v2139 = vld [vmem:[%s17] sm:$0xff]
        %v2140 = vld [vmem:[%s17 + $0x8] sm:$0xff]
        %v2141 = vld [vmem:[%s17 + $0x10] sm:$0xff]
        %v2142 = vld [vmem:[%s17 + $0x18] sm:$0xff]
        %v2143 = vld [vmem:[%s17 + $0x20] sm:$0xff]
        %v2144 = vld [vmem:[%s17 + $0x28] sm:$0xff]
        %v2145 = vld [vmem:[%s17 + $0x30] sm:$0xff]
        %v2146 = vld [vmem:[%s17 + $0x38] sm:$0xff]
        %vm2147 = vcmask 523264
        %v2149 = vsel %vm2147, %v2138, 0
        %2151 = vmatprep.subr.mxu0 0.0
        %2152 = vmatpush1.msra.mxu0 %v2139
        %2153 = vmatprep.subr.mxu0 0.0
        %2154 = vmatpush1.msra.mxu0 %v2140
        %2155 = vmatprep.subr.mxu0 0.0
        %2156 = vmatpush1.msra.mxu0 %v2141
        %2157 = vmatprep.subr.mxu0 0.0
        %2158 = vmatpush1.msra.mxu0 %v2142
        %2159 = vmatprep.subr.mxu0 0.0
        %2160 = vmatpush1.msra.mxu0 %v2143
        %2161 = vmatprep.subr.mxu0 0.0
        %2162 = vmatpush1.msra.mxu0 %v2144
        %2163 = vmatprep.subr.mxu0 0.0
        %2164 = vmatpush1.msra.mxu0 %v2145
        %2165 = vmatprep.subr.mxu0 0.0
        %2166 = vmatpush1.msra.mxu0 %v2146
        %2167 = vmatprep.subr.mxu0 0.0
        %2168 = vmatpush1.msra.mxu0 0.0
        %2169 = vmatprep.subr.mxu0 0.0
        %2170 = vmatpush1.msra.mxu0 0.0
        %2171 = vmatprep.subr.mxu0 0.0
        %2172 = vmatpush1.msra.mxu0 0.0
        %2173 = vmatprep.subr.mxu0 0.0
        %2174 = vmatpush1.msra.mxu0 0.0
        %2175 = vmatprep.subr.mxu0 0.0
        %2176 = vmatpush1.msra.mxu0 0.0
        %2177 = vmatprep.subr.mxu0 0.0
        %2178 = vmatpush1.msra.mxu0 0.0
        %2179 = vmatprep.subr.mxu0 0.0
        %2180 = vmatpush1.msra.mxu0 0.0
        %2181 = vmatprep.subr.mxu0 0.0
        %2182 = vmatpush1.msra.mxu0 0.0
        %2183 = vmatprep.subr.mxu0 0.0
        %2184 = vmatpush1.msra.mxu0 0.0
        %2185 = vmatprep.subr.mxu0 0.0
        %2186 = vmatpush1.msra.mxu0 0.0
        %2187 = vmatprep.subr.mxu0 0.0
        %2188 = vmatpush1.msra.mxu0 0.0
        %2189 = vmatprep.subr.mxu0 0.0
        %2190 = vmatpush1.msra.mxu0 0.0
        %2191 = vmatprep.subr.mxu0 0.0
        %2192 = vmatpush1.msra.mxu0 0.0
        %2193 = vmatprep.subr.mxu0 0.0
        %2194 = vmatpush1.msra.mxu0 0.0
        %2195 = vmatprep.subr.mxu0 0.0
        %2196 = vmatpush1.msra.mxu0 0.0
        %2197 = vmatprep.subr.mxu0 0.0
        %2198 = vmatpush1.msra.mxu0 0.0
        %2199 = vmatprep.subr.mxu0 0.0
        %2200 = vmatpush1.msra.mxu0 0.0
        %2201 = vmatprep.subr.mxu0 0.0
        %2202 = vmatpush1.msra.mxu0 0.0
        %2203 = vmatprep.subr.mxu0 0.0
        %2204 = vmatpush1.msra.mxu0 0.0
        %2205 = vmatprep.subr.mxu0 0.0
        %2206 = vmatpush1.msra.mxu0 0.0
        %2207 = vmatprep.subr.mxu0 0.0
        %2208 = vmatpush1.msra.mxu0 0.0
        %2209 = vmatprep.subr.mxu0 0.0
        %2210 = vmatpush1.msra.mxu0 0.0
        %2211 = vmatprep.subr.mxu0 0.0
        %2212 = vmatpush1.msra.mxu0 0.0
        %2213 = vmatprep.subr.mxu0 0.0
        %2214 = vmatpush1.msra.mxu0 0.0
        %2215 = vmatprep.mubr.f32.mxu0 0.0
        %2216 = vmatmul.mubr.f32.gmra.mrb[0].mxu0 %v2149
        %v2217 = vpop.f32.mrb[0].mxu0
        %v2218 = vadd.f32 0.0, %v2217
        %v2219 = vpop.f32.mrb[0].mxu0
        %2220 = vdwg.mxu0
        %v2221 = vadd.f32 %v2029, %v2218
        %v2222 = vld [vmem:[%s18] sm:$0x1]
        %v2224 = vlaneseq
        %v2225 = vshrl.u32 %v2224, 7
        %v2226 = vsub.s32 0, %v2225
        %v2227 = vrot.slane %v2222, %v2226
        %v2229 = vadd.f32 %v2221, %v2227
        %v2230 = vsel %vm676, %v2229, 0.0
        %2231 = vadd.xlane.f32.xlu0 %v2230
        %v2232 = vpop.xlane.xlu0 %2231
        %v2233 = vmul.f32 %v2232, %v680
        %v2234 = vsub.f32 %v2229, %v2233
        %v2235 = vmul.f32 %v2234, %v2234
        %v2236 = vsel %vm676, %v2235, 0.0
        %2237 = vadd.xlane.f32.xlu0 %v2236
        %v2238 = vpop.xlane.xlu0 %2237
        %v2239 = vmul.f32 %v2238, %v680
        %v2240 = vadd.f32 %v2239, 1e-06
        %v2241 = vrsqrt.pop %v2240
        %v2242 = vmul.f32 %v2234, %v2241
        %v2243 = vlaneseq
        %v2244 = vshrl.u32 %v2243, 7
        %v2245 = vsub.s32 0, %v2244
        %v2246 = vrot.slane %v674, %v2245
        %v2247 = vmul.f32 %v2242, %v2246
        %v2248 = vlaneseq
        %v2249 = vshrl.u32 %v2248, 7
        %v2250 = vsub.s32 1, %v2249
        %v2251 = vrot.slane %v674, %v2250
        %v2252 = vadd.f32 %v2247, %v2251
        %2253 = vst.msk [vmem:[%s657] sm:$0xff] %vm676, %v2252
        %s2254 = sand.u32 %s482, 1
        %s2255 = scalar_lea.sflag [#allocation3], %s2254
        %s2256 = sand.u32 %s482, 1
        %s2257 = smul.addr %s2256, 8
        %s2258 = scalar_lea.vmem [#allocation2], %s2257
        // Predicated region
        $region101: #{tpu_custom_call.1} parent=99 // pred_check
          %p2259 = pneg %p492
        $region102: #{tpu_custom_call.1} parent=99 // pred_check_branch
          %2261 = sbr.rel (%p2259) target = $region104
        $region103: #{tpu_custom_call.1} parent=99 // pred_region
          %s2263 = ssub.s32 128, 128
          %2264 = vsyncadd %s2255, %s2263
          %s2265 = smul.addr %s34, 128
          %s2266 = scalar_lea.hbm %s20, %s2265
          %s2268 = sshll.u32 %s2258, 4
          %s2269 = int_to_ptr.vmem [resolvable:$true] %s2268
          %2271 = dma.vmem_to_hbm [thread:$0]  %s2269, 128, %s2266, %s2255
        $region104: #{tpu_custom_call.1} parent=99 // pred_fallthru
          _
      $region100: #{tpu_custom_call.1} parent=5 // pred_fallthru
        _
      %p2272 = scmp.le.s32.totalorder 2, %s29
      // Predicated region
      $region105: #{tpu_custom_call.1} parent=5 // pred_check
        %p2273 = pneg %p2272
      $region106: #{tpu_custom_call.1} parent=5 // pred_check_branch
        %2275 = sbr.rel (%p2273) target = $region108
      $region107: #{tpu_custom_call.1} parent=5 // pred_region
        %s2276 = ssub.s32 %s29, 2
        // Predicated region
        $region109: #{tpu_custom_call.1} parent=107 // pred_check
          %p2277 = pneg %p498
        $region110: #{tpu_custom_call.1} parent=107 // pred_check_branch
          %2279 = sbr.rel (%p2277) target = $region112
        $region111: #{tpu_custom_call.1} parent=107 // pred_region
          %s2280 = sand.u32 %s483, 1
          %s2281 = scalar_lea.sflag [#allocation3], %s2280
          %s2282 = sand.u32 %s483, 1
          %s2283 = smul.addr %s2282, 8
          %s2284 = scalar_lea.vmem [#allocation2], %s2283
          %2285 = dma.done %s2281, 128
        $region112: #{tpu_custom_call.1} parent=107 // pred_fallthru
          _
      $region108: #{tpu_custom_call.1} parent=5 // pred_fallthru
        _
    $region6: #{tpu_custom_call.1} parent=1 // loop_footer
      %s33 = sadd.s32 1, %s29
    $region7: #{tpu_custom_call.1} parent=1 // loop_footer_branch
      %28 = sbr.rel target = $region3
    $region8: #{tpu_custom_call.1} parent=1 // loop_exit
      _
    %2286 = vsyncpa [#allocation3], 1
    %s2287 = scalar_lea.sflag [#allocation3], 1
    %2288 = vsyncpa %s2287, 1

</llo_original>
